<compile_context>
chip_gen: v5e
topology: v5e:2x2
jax: 0.10.0
libtpu: 0.0.40
codegen_flags: <defaults>
</compile_context>

<pallas_src>
import functools

import jax
import jax.numpy as jnp
from jax.experimental import pallas as pl
from jax.experimental.pallas import tpu as pltpu


# ----------------------------------------------------------------------------
# helpers
# ----------------------------------------------------------------------------
def _pick_block(total, cap):
    """Largest multiple-of-16 divisor of `total` that is <= cap (or `total`)."""
    if total <= cap:
        return total
    t = (min(cap, total) // 16) * 16
    while t >= 16:
        if total % t == 0:
            return t
        t -= 16
    return total  # block == full dim is always legal


# ----------------------------------------------------------------------------
# Kernel 1: fused avg-pool + max-pool + FilterLayer MLP  ->  xe_w, xt_w
# ----------------------------------------------------------------------------
def _pool_fc_kernel(x_ref, e_ref, t_ref,
                    w1a_ref, w1b_ref, b1_ref, w2_ref, b2_ref,
                    xew_ref, xtw_ref,
                    sx, se, st, mx, me, mt, *, inv_hw):
    j = pl.program_id(1)
    x = x_ref[0].astype(jnp.float32)   # (tile, C)
    e = e_ref[0].astype(jnp.float32)
    t = t_ref[0].astype(jnp.float32)

    @pl.when(j == 0)
    def _():
        sx[...] = jnp.zeros_like(sx)
        se[...] = jnp.zeros_like(se)
        st[...] = jnp.zeros_like(st)
        mx[...] = jnp.full_like(mx, -jnp.inf)
        me[...] = jnp.full_like(me, -jnp.inf)
        mt[...] = jnp.full_like(mt, -jnp.inf)

    sx[...] += jnp.sum(x, axis=0, keepdims=True)
    se[...] += jnp.sum(e, axis=0, keepdims=True)
    st[...] += jnp.sum(t, axis=0, keepdims=True)
    mx[...] = jnp.maximum(mx[...], jnp.max(x, axis=0, keepdims=True))
    me[...] = jnp.maximum(me[...], jnp.max(e, axis=0, keepdims=True))
    mt[...] = jnp.maximum(mt[...], jnp.max(t, axis=0, keepdims=True))

    @pl.when(j == pl.num_programs(1) - 1)
    def _():
        # pooled descriptor per channel: mean + max   (each (1, C))
        p_x = sx[...] * inv_hw + mx[...]
        p_e = se[...] * inv_hw + me[...]
        p_t = st[...] * inv_hw + mt[...]

        w1a = w1a_ref[...]      # (hidden, C)  rows of W1 for the "x" half
        w1b = w1b_ref[...]      # (hidden, C)  rows of W1 for the "e"/"t" half
        b1 = b1_ref[...]        # (hidden, 1)
        w2 = w2_ref[...]        # (hidden, C)
        b2 = b2_ref[...]        # (1, C)

        def fc(pa, pb):
            # tiny MLP: done with VPU broadcasts + XLU reductions (hidden is tiny)
            h = (jnp.sum(pa * w1a, axis=1, keepdims=True)
                 + jnp.sum(pb * w1b, axis=1, keepdims=True) + b1)   # (hidden, 1)
            h = jnp.maximum(h, 0.0)
            y = jnp.sum(h * w2, axis=0, keepdims=True) + b2         # (1, C)
            return 1.0 / (1.0 + jnp.exp(-y))                        # sigmoid

        xew_ref[0] = fc(p_x, p_e)   # gate for the (x, e) branch
        xtw_ref[0] = fc(p_x, p_t)   # gate for the (x, t) branch


def filter_gates(xs, es, ts, params, n, hw, c):
    """xs/es/ts: (N, HW, C) bf16  ->  (xe_w, xt_w) each (N, 1, C) fp32."""
    hidden = params["w1a_t"].shape[0]
    tile = _pick_block(hw, 2048)
    grid = (n, hw // tile)
    pix_spec = pl.BlockSpec((1, tile, c), lambda b, j: (b, j, 0))
    cst = lambda b, j: (0, 0)
    return pl.pallas_call(
        functools.partial(_pool_fc_kernel, inv_hw=1.0 / float(hw)),
        out_shape=(jax.ShapeDtypeStruct((n, 1, c), jnp.float32),
                   jax.ShapeDtypeStruct((n, 1, c), jnp.float32)),
        grid=grid,
        in_specs=[
            pix_spec, pix_spec, pix_spec,
            pl.BlockSpec((hidden, c), cst),
            pl.BlockSpec((hidden, c), cst),
            pl.BlockSpec((hidden, 1), cst),
            pl.BlockSpec((hidden, c), cst),
            pl.BlockSpec((1, c), cst),
        ],
        out_specs=(pl.BlockSpec((1, 1, c), lambda b, j: (b, 0, 0)),
                   pl.BlockSpec((1, 1, c), lambda b, j: (b, 0, 0))),
        scratch_shapes=[pltpu.VMEM((1, c), jnp.float32) for _ in range(6)],
        compiler_params=pltpu.CompilerParams(
            dimension_semantics=("parallel", "arbitrary")),
    )(xs, es, ts,
      params["w1a_t"], params["w1b_t"], params["b1"],
      params["w2"], params["b2"])


# ----------------------------------------------------------------------------
# Kernel 2: fused FSP gating + three shared conv1 (1x1) + residual
# ----------------------------------------------------------------------------
def _feem_main_kernel(x_ref, e_ref, t_ref, xew_ref, xtw_ref,
                      wa_ref, wb_ref, bias_ref, o_ref):
    x = x_ref[0].astype(jnp.float32)        # (tile, C)
    e = e_ref[0].astype(jnp.float32)
    t = t_ref[0].astype(jnp.float32)
    xe_w = xew_ref[0]                       # (1, C) fp32, broadcast on VPU
    xt_w = xtw_ref[0]
    wa = wa_ref[...]                        # (C, C) bf16  (input channels 0..C-1)
    wb = wb_ref[...]                        # (C, C) bf16  (input channels C..2C-1)
    bias = bias_ref[...]                    # (1, C) fp32

    # FSP
    rec_e = xe_w * e
    rec_t = xt_w * t
    rec_x = (xe_w + xt_w + 1.0) * x

    def conv1(a1, a2):
        # conv1(cat([a1, a2], channel)) == a1 @ Wa + a2 @ Wb + bias
        y = jnp.dot(a1.astype(jnp.bfloat16), wa, preferred_element_type=jnp.float32)
        y = y + jnp.dot(a2.astype(jnp.bfloat16), wb, preferred_element_type=jnp.float32)
        return y + bias

    rec_xe = conv1(rec_x + rec_e, rec_x + e)
    rec_xt = conv1(rec_x + rec_t, rec_x + t)
    o_ref[0] = conv1(rec_xt, rec_xe) + rec_x


def feem_main(xs, es, ts, xe_w, xt_w, params, n, hw, c):
    tile = _pick_block(hw, 512)
    grid = (n, hw // tile)
    pix_spec = pl.BlockSpec((1, tile, c), lambda b, j: (b, j, 0))
    gate_spec = pl.BlockSpec((1, 1, c), lambda b, j: (b, 0, 0))
    cst = lambda b, j: (0, 0)
    return pl.pallas_call(
        _feem_main_kernel,
        out_shape=jax.ShapeDtypeStruct((n, hw, c), jnp.float32),
        grid=grid,
        in_specs=[
            pix_spec, pix_spec, pix_spec,
            gate_spec, gate_spec,
            pl.BlockSpec((c, c), cst),
            pl.BlockSpec((c, c), cst),
            pl.BlockSpec((1, c), cst),
        ],
        out_specs=pix_spec,
        compiler_params=pltpu.CompilerParams(
            dimension_semantics=("parallel", "parallel")),
    )(xs, es, ts, xe_w, xt_w,
      params["wa"].astype(jnp.bfloat16), params["wb"].astype(jnp.bfloat16),
      params["bias"])


# ----------------------------------------------------------------------------
# Parameters (deterministic synthetic init, fp32 masters)
# ----------------------------------------------------------------------------
def init_params(key, c, reduction=16):
    hidden = max(1, c // reduction)
    ks = jax.random.split(key, 8)
    w = lambda k, shape, s=0.1: s * jax.random.normal(k, shape, jnp.float32)
    p = {}
    # FilterLayer fc (shared between the (x,e) and (x,t) branches):
    #   Linear(2C -> hidden): W1 split by input half, stored transposed (hidden, C)
    p["w1a_t"] = w(ks[0], (hidden, c))
    p["w1b_t"] = w(ks[1], (hidden, c))
    p["b1"] = w(ks[2], (hidden, 1), 0.05)
    #   Linear(hidden -> C), stored as (hidden, C)
    p["w2"] = w(ks[3], (hidden, c))
    p["b2"] = w(ks[4], (1, c), 0.05)
    # conv1: Conv2d(2C -> C, 1x1, bias), weight split by input half: (C, C) each
    p["wa"] = w(ks[5], (c, c))
    p["wb"] = w(ks[6], (c, c))
    p["bias"] = w(ks[7], (1, c), 0.05)
    return p


# ----------------------------------------------------------------------------
# FEEM forward (Pallas) and pure-JAX fp32 reference
# ----------------------------------------------------------------------------
def feem_forward(params, x_nchw, e_nchw, t_nchw):
    x = jnp.transpose(x_nchw, (0, 2, 3, 1))          # NHWC
    e = jnp.transpose(e_nchw, (0, 2, 3, 1))
    t = jnp.transpose(t_nchw, (0, 2, 3, 1))
    n, h, w, c = x.shape
    hw = h * w

    # heavy activations in bf16 (MXU-native, half the DMA bytes); math in fp32
    xs = x.reshape(n, hw, c).astype(jnp.bfloat16)
    es = e.reshape(n, hw, c).astype(jnp.bfloat16)
    ts = t.reshape(n, hw, c).astype(jnp.bfloat16)

    xe_w, xt_w = filter_gates(xs, es, ts, params, n, hw, c)      # (N,1,C) fp32
    out = feem_main(xs, es, ts, xe_w, xt_w, params, n, hw, c)    # (N,HW,C) fp32

    return jnp.transpose(out.reshape(n, h, w, c), (0, 3, 1, 2))  # NCHW


def feem_reference(params, x_nchw, e_nchw, t_nchw):
    """Pure-jnp fp32 reference mirroring the PyTorch forward."""
    p = params
    x = jnp.transpose(x_nchw, (0, 2, 3, 1)).astype(jnp.float32)
    e = jnp.transpose(e_nchw, (0, 2, 3, 1)).astype(jnp.float32)
    t = jnp.transpose(t_nchw, (0, 2, 3, 1)).astype(jnp.float32)

    pool = lambda a: jnp.mean(a, axis=(1, 2)) + jnp.max(a, axis=(1, 2))  # (N,C)
    px, pe, pt = pool(x), pool(e), pool(t)

    def fc(pa, pb):
        h = pa @ p["w1a_t"].T + pb @ p["w1b_t"].T + p["b1"][:, 0]
        h = jnp.maximum(h, 0.0)
        return jax.nn.sigmoid(h @ p["w2"] + p["b2"])

    xe_w = fc(px, pe)[:, None, None, :]
    xt_w = fc(px, pt)[:, None, None, :]
    rec_e = xe_w * e
    rec_t = xt_w * t
    rec_x = (xe_w + xt_w + 1.0) * x

    conv1 = lambda a1, a2: a1 @ p["wa"] + a2 @ p["wb"] + p["bias"]
    rec_xe = conv1(rec_x + rec_e, rec_x + e)
    rec_xt = conv1(rec_x + rec_t, rec_x + t)
    rec_out = conv1(rec_xt, rec_xe) + rec_x
    return jnp.transpose(rec_out, (0, 3, 1, 2))


# ----------------------------------------------------------------------------
if __name__ == "__main__":
    in_planes = 32           # must be >= reduction(=16) as in the PyTorch module
    nb, hh, ww = 2, 16, 16

    key = jax.random.PRNGKey(0)
    kp, kx, ke, kt = jax.random.split(key, 4)
    params = init_params(kp, in_planes)

    x = jax.random.normal(kx, (nb, in_planes, hh, ww), jnp.float32)
    e = jax.random.normal(ke, (nb, in_planes, hh, ww), jnp.float32)
    t = jax.random.normal(kt, (nb, in_planes, hh, ww), jnp.float32)

    out = feem_forward(params, x, e, t)
    out = jax.block_until_ready(out)
    assert out.shape == (nb, in_planes, hh, ww)
    assert bool(jnp.all(jnp.isfinite(out)))

    ref = feem_reference(params, x, e, t)
    err = float(jnp.max(jnp.abs(out - ref)))
    # bf16 MXU inputs -> small quantization error vs the fp32 reference
    assert err < 0.2, f"max abs error {err}"

    print("KERNEL_OK")
</pallas_src>

<mosaic_0001>
module attributes {stable_mosaic.version = 11 : i64} {
  func.func @_pool_fc_kernel(%arg0: i32, %arg1: i32, %arg2: memref<1x256x32xbf16, #tpu.memory_space<vmem>>, %arg3: memref<1x256x32xbf16, #tpu.memory_space<vmem>>, %arg4: memref<1x256x32xbf16, #tpu.memory_space<vmem>>, %arg5: memref<2x32xf32, #tpu.memory_space<vmem>>, %arg6: memref<2x32xf32, #tpu.memory_space<vmem>>, %arg7: memref<2x1xf32, #tpu.memory_space<vmem>>, %arg8: memref<2x32xf32, #tpu.memory_space<vmem>>, %arg9: memref<1x32xf32, #tpu.memory_space<vmem>>, %arg10: memref<1x1x32xf32, #tpu.memory_space<vmem>>, %arg11: memref<1x1x32xf32, #tpu.memory_space<vmem>>, %arg12: memref<1x32xf32, #tpu.memory_space<vmem>>, %arg13: memref<1x32xf32, #tpu.memory_space<vmem>>, %arg14: memref<1x32xf32, #tpu.memory_space<vmem>>, %arg15: memref<1x32xf32, #tpu.memory_space<vmem>>, %arg16: memref<1x32xf32, #tpu.memory_space<vmem>>, %arg17: memref<1x32xf32, #tpu.memory_space<vmem>>) attributes {dimension_semantics = [#tpu.dimension_semantics<parallel>, #tpu.dimension_semantics<arbitrary>], iteration_bounds = array<i64: 2, 1>, scalar_prefetch = 0 : i64, scratch_operands = 6 : i64, tpu.core_type = #tpu.core_type<tc>, window_params = [{transform_indices = @transform_0, window_bounds = array<i64: 1, 256, 32>}, {transform_indices = @transform_1, window_bounds = array<i64: 1, 256, 32>}, {transform_indices = @transform_2, window_bounds = array<i64: 1, 256, 32>}, {pipeline_mode = #tpu.pipeline_mode<synchronous>, transform_indices = @transform_3, window_bounds = array<i64: 2, 32>}, {pipeline_mode = #tpu.pipeline_mode<synchronous>, transform_indices = @transform_4, window_bounds = array<i64: 2, 32>}, {pipeline_mode = #tpu.pipeline_mode<synchronous>, transform_indices = @transform_5, window_bounds = array<i64: 2, 1>}, {pipeline_mode = #tpu.pipeline_mode<synchronous>, transform_indices = @transform_6, window_bounds = array<i64: 2, 32>}, {pipeline_mode = #tpu.pipeline_mode<synchronous>, transform_indices = @transform_7, window_bounds = array<i64: 1, 32>}, {transform_indices = @transform_8, window_bounds = array<i64: 1, 1, 32>}, {transform_indices = @transform_9, window_bounds = array<i64: 1, 1, 32>}]} {
    %c0 = arith.constant 0 : index
    %c0_0 = arith.constant 0 : index
    %c0_1 = arith.constant 0 : index
    %0 = vector.load %arg2[%c0, %c0_0, %c0_1] : memref<1x256x32xbf16, #tpu.memory_space<vmem>>, vector<1x256x32xbf16>
    %1 = vector.shape_cast %0 : vector<1x256x32xbf16> to vector<256x32xbf16>
    %2 = arith.extf %1 : vector<256x32xbf16> to vector<256x32xf32>
    %c0_2 = arith.constant 0 : index
    %c0_3 = arith.constant 0 : index
    %c0_4 = arith.constant 0 : index
    %3 = vector.load %arg3[%c0_2, %c0_3, %c0_4] : memref<1x256x32xbf16, #tpu.memory_space<vmem>>, vector<1x256x32xbf16>
    %4 = vector.shape_cast %3 : vector<1x256x32xbf16> to vector<256x32xbf16>
    %5 = arith.extf %4 : vector<256x32xbf16> to vector<256x32xf32>
    %c0_5 = arith.constant 0 : index
    %c0_6 = arith.constant 0 : index
    %c0_7 = arith.constant 0 : index
    %6 = vector.load %arg4[%c0_5, %c0_6, %c0_7] : memref<1x256x32xbf16, #tpu.memory_space<vmem>>, vector<1x256x32xbf16>
    %7 = vector.shape_cast %6 : vector<1x256x32xbf16> to vector<256x32xbf16>
    %8 = arith.extf %7 : vector<256x32xbf16> to vector<256x32xf32>
    %c0_i32 = arith.constant 0 : i32
    %9 = arith.cmpi eq, %arg1, %c0_i32 : i32
    %10 = arith.extui %9 : i1 to i32
    %c0_i32_8 = arith.constant 0 : i32
    %11 = arith.cmpi ne, %10, %c0_i32_8 : i32
    scf.if %11 {
      %cst_40 = arith.constant 0.000000e+00 : f32
      %45 = vector.broadcast %cst_40 : f32 to vector<1x32xf32>
      %c0_41 = arith.constant 0 : index
      %c0_42 = arith.constant 0 : index
      %46 = vector.load %arg12[%c0_41, %c0_42] : memref<1x32xf32, #tpu.memory_space<vmem>>, vector<1x32xf32>
      tpu.vector_store %arg12[%c0_41, %c0_42], %45 {strides = array<i32>} : memref<1x32xf32, #tpu.memory_space<vmem>>, vector<1x32xf32>,
      %cst_43 = arith.constant 0.000000e+00 : f32
      %47 = vector.broadcast %cst_43 : f32 to vector<1x32xf32>
      %c0_44 = arith.constant 0 : index
      %c0_45 = arith.constant 0 : index
      %48 = vector.load %arg13[%c0_44, %c0_45] : memref<1x32xf32, #tpu.memory_space<vmem>>, vector<1x32xf32>
      tpu.vector_store %arg13[%c0_44, %c0_45], %47 {strides = array<i32>} : memref<1x32xf32, #tpu.memory_space<vmem>>, vector<1x32xf32>,
      %cst_46 = arith.constant 0.000000e+00 : f32
      %49 = vector.broadcast %cst_46 : f32 to vector<1x32xf32>
      %c0_47 = arith.constant 0 : index
      %c0_48 = arith.constant 0 : index
      %50 = vector.load %arg14[%c0_47, %c0_48] : memref<1x32xf32, #tpu.memory_space<vmem>>, vector<1x32xf32>
      tpu.vector_store %arg14[%c0_47, %c0_48], %49 {strides = array<i32>} : memref<1x32xf32, #tpu.memory_space<vmem>>, vector<1x32xf32>,
      %cst_49 = arith.constant 0xFF800000 : f32
      %51 = vector.broadcast %cst_49 : f32 to vector<1x32xf32>
      %c0_50 = arith.constant 0 : index
      %c0_51 = arith.constant 0 : index
      %52 = vector.load %arg15[%c0_50, %c0_51] : memref<1x32xf32, #tpu.memory_space<vmem>>, vector<1x32xf32>
      tpu.vector_store %arg15[%c0_50, %c0_51], %51 {strides = array<i32>} : memref<1x32xf32, #tpu.memory_space<vmem>>, vector<1x32xf32>,
      %cst_52 = arith.constant 0xFF800000 : f32
      %53 = vector.broadcast %cst_52 : f32 to vector<1x32xf32>
      %c0_53 = arith.constant 0 : index
      %c0_54 = arith.constant 0 : index
      %54 = vector.load %arg16[%c0_53, %c0_54] : memref<1x32xf32, #tpu.memory_space<vmem>>, vector<1x32xf32>
      tpu.vector_store %arg16[%c0_53, %c0_54], %53 {strides = array<i32>} : memref<1x32xf32, #tpu.memory_space<vmem>>, vector<1x32xf32>,
      %cst_55 = arith.constant 0xFF800000 : f32
      %55 = vector.broadcast %cst_55 : f32 to vector<1x32xf32>
      %c0_56 = arith.constant 0 : index
      %c0_57 = arith.constant 0 : index
      %56 = vector.load %arg17[%c0_56, %c0_57] : memref<1x32xf32, #tpu.memory_space<vmem>>, vector<1x32xf32>
      tpu.vector_store %arg17[%c0_56, %c0_57], %55 {strides = array<i32>} : memref<1x32xf32, #tpu.memory_space<vmem>>, vector<1x32xf32>,
    } else {
    }
    %c0_9 = arith.constant 0 : index
    %c0_10 = arith.constant 0 : index
    %12 = vector.load %arg12[%c0_9, %c0_10] : memref<1x32xf32, #tpu.memory_space<vmem>>, vector<1x32xf32>
    %cst = arith.constant dense<0.000000e+00> : vector<32xf32>
    %13 = vector.multi_reduction <add>, %2, %cst [0] : vector<256x32xf32> to vector<32xf32>
    %14 = vector.shape_cast %13 : vector<32xf32> to vector<1x32xf32>
    %15 = arith.addf %12, %14 : vector<1x32xf32>
    %c0_11 = arith.constant 0 : index
    %c0_12 = arith.constant 0 : index
    %16 = vector.load %arg12[%c0_11, %c0_12] : memref<1x32xf32, #tpu.memory_space<vmem>>, vector<1x32xf32>
    tpu.vector_store %arg12[%c0_11, %c0_12], %15 {strides = array<i32>} : memref<1x32xf32, #tpu.memory_space<vmem>>, vector<1x32xf32>,
    %c0_13 = arith.constant 0 : index
    %c0_14 = arith.constant 0 : index
    %17 = vector.load %arg13[%c0_13, %c0_14] : memref<1x32xf32, #tpu.memory_space<vmem>>, vector<1x32xf32>
    %cst_15 = arith.constant dense<0.000000e+00> : vector<32xf32>
    %18 = vector.multi_reduction <add>, %5, %cst_15 [0] : vector<256x32xf32> to vector<32xf32>
    %19 = vector.shape_cast %18 : vector<32xf32> to vector<1x32xf32>
    %20 = arith.addf %17, %19 : vector<1x32xf32>
    %c0_16 = arith.constant 0 : index
    %c0_17 = arith.constant 0 : index
    %21 = vector.load %arg13[%c0_16, %c0_17] : memref<1x32xf32, #tpu.memory_space<vmem>>, vector<1x32xf32>
    tpu.vector_store %arg13[%c0_16, %c0_17], %20 {strides = array<i32>} : memref<1x32xf32, #tpu.memory_space<vmem>>, vector<1x32xf32>,
    %c0_18 = arith.constant 0 : index
    %c0_19 = arith.constant 0 : index
    %22 = vector.load %arg14[%c0_18, %c0_19] : memref<1x32xf32, #tpu.memory_space<vmem>>, vector<1x32xf32>
    %cst_20 = arith.constant dense<0.000000e+00> : vector<32xf32>
    %23 = vector.multi_reduction <add>, %8, %cst_20 [0] : vector<256x32xf32> to vector<32xf32>
    %24 = vector.shape_cast %23 : vector<32xf32> to vector<1x32xf32>
    %25 = arith.addf %22, %24 : vector<1x32xf32>
    %c0_21 = arith.constant 0 : index
    %c0_22 = arith.constant 0 : index
    %26 = vector.load %arg14[%c0_21, %c0_22] : memref<1x32xf32, #tpu.memory_space<vmem>>, vector<1x32xf32>
    tpu.vector_store %arg14[%c0_21, %c0_22], %25 {strides = array<i32>} : memref<1x32xf32, #tpu.memory_space<vmem>>, vector<1x32xf32>,
    %c0_23 = arith.constant 0 : index
    %c0_24 = arith.constant 0 : index
    %27 = vector.load %arg15[%c0_23, %c0_24] : memref<1x32xf32, #tpu.memory_space<vmem>>, vector<1x32xf32>
    %cst_25 = arith.constant dense<0xFF800000> : vector<32xf32>
    %28 = vector.multi_reduction <maximumf>, %2, %cst_25 [0] : vector<256x32xf32> to vector<32xf32>
    %29 = vector.shape_cast %28 : vector<32xf32> to vector<1x32xf32>
    %30 = arith.maximumf %27, %29 : vector<1x32xf32>
    %c0_26 = arith.constant 0 : index
    %c0_27 = arith.constant 0 : index
    %31 = vector.load %arg15[%c0_26, %c0_27] : memref<1x32xf32, #tpu.memory_space<vmem>>, vector<1x32xf32>
    tpu.vector_store %arg15[%c0_26, %c0_27], %30 {strides = array<i32>} : memref<1x32xf32, #tpu.memory_space<vmem>>, vector<1x32xf32>,
    %c0_28 = arith.constant 0 : index
    %c0_29 = arith.constant 0 : index
    %32 = vector.load %arg16[%c0_28, %c0_29] : memref<1x32xf32, #tpu.memory_space<vmem>>, vector<1x32xf32>
    %cst_30 = arith.constant dense<0xFF800000> : vector<32xf32>
    %33 = vector.multi_reduction <maximumf>, %5, %cst_30 [0] : vector<256x32xf32> to vector<32xf32>
    %34 = vector.shape_cast %33 : vector<32xf32> to vector<1x32xf32>
    %35 = arith.maximumf %32, %34 : vector<1x32xf32>
    %c0_31 = arith.constant 0 : index
    %c0_32 = arith.constant 0 : index
    %36 = vector.load %arg16[%c0_31, %c0_32] : memref<1x32xf32, #tpu.memory_space<vmem>>, vector<1x32xf32>
    tpu.vector_store %arg16[%c0_31, %c0_32], %35 {strides = array<i32>} : memref<1x32xf32, #tpu.memory_space<vmem>>, vector<1x32xf32>,
    %c0_33 = arith.constant 0 : index
    %c0_34 = arith.constant 0 : index
    %37 = vector.load %arg17[%c0_33, %c0_34] : memref<1x32xf32, #tpu.memory_space<vmem>>, vector<1x32xf32>
    %cst_35 = arith.constant dense<0xFF800000> : vector<32xf32>
    %38 = vector.multi_reduction <maximumf>, %8, %cst_35 [0] : vector<256x32xf32> to vector<32xf32>
    %39 = vector.shape_cast %38 : vector<32xf32> to vector<1x32xf32>
    %40 = arith.maximumf %37, %39 : vector<1x32xf32>
    %c0_36 = arith.constant 0 : index
    %c0_37 = arith.constant 0 : index
    %41 = vector.load %arg17[%c0_36, %c0_37] : memref<1x32xf32, #tpu.memory_space<vmem>>, vector<1x32xf32>
    tpu.vector_store %arg17[%c0_36, %c0_37], %40 {strides = array<i32>} : memref<1x32xf32, #tpu.memory_space<vmem>>, vector<1x32xf32>,
    %c0_i32_38 = arith.constant 0 : i32
    %42 = arith.cmpi eq, %arg1, %c0_i32_38 : i32
    %43 = arith.extui %42 : i1 to i32
    %c0_i32_39 = arith.constant 0 : i32
    %44 = arith.cmpi ne, %43, %c0_i32_39 : i32
    scf.if %44 {
      %c0_40 = arith.constant 0 : index
      %c0_41 = arith.constant 0 : index
      %45 = vector.load %arg12[%c0_40, %c0_41] : memref<1x32xf32, #tpu.memory_space<vmem>>, vector<1x32xf32>
      %cst_42 = arith.constant 3.906250e-03 : f32
      %46 = vector.broadcast %cst_42 : f32 to vector<1x32xf32>
      %47 = arith.mulf %45, %46 : vector<1x32xf32>
      %c0_43 = arith.constant 0 : index
      %c0_44 = arith.constant 0 : index
      %48 = vector.load %arg15[%c0_43, %c0_44] : memref<1x32xf32, #tpu.memory_space<vmem>>, vector<1x32xf32>
      %49 = arith.addf %47, %48 : vector<1x32xf32>
      %c0_45 = arith.constant 0 : index
      %c0_46 = arith.constant 0 : index
      %50 = vector.load %arg13[%c0_45, %c0_46] : memref<1x32xf32, #tpu.memory_space<vmem>>, vector<1x32xf32>
      %cst_47 = arith.constant 3.906250e-03 : f32
      %51 = vector.broadcast %cst_47 : f32 to vector<1x32xf32>
      %52 = arith.mulf %50, %51 : vector<1x32xf32>
      %c0_48 = arith.constant 0 : index
      %c0_49 = arith.constant 0 : index
      %53 = vector.load %arg16[%c0_48, %c0_49] : memref<1x32xf32, #tpu.memory_space<vmem>>, vector<1x32xf32>
      %54 = arith.addf %52, %53 : vector<1x32xf32>
      %c0_50 = arith.constant 0 : index
      %c0_51 = arith.constant 0 : index
      %55 = vector.load %arg14[%c0_50, %c0_51] : memref<1x32xf32, #tpu.memory_space<vmem>>, vector<1x32xf32>
      %cst_52 = arith.constant 3.906250e-03 : f32
      %56 = vector.broadcast %cst_52 : f32 to vector<1x32xf32>
      %57 = arith.mulf %55, %56 : vector<1x32xf32>
      %c0_53 = arith.constant 0 : index
      %c0_54 = arith.constant 0 : index
      %58 = vector.load %arg17[%c0_53, %c0_54] : memref<1x32xf32, #tpu.memory_space<vmem>>, vector<1x32xf32>
      %59 = arith.addf %57, %58 : vector<1x32xf32>
      %c0_55 = arith.constant 0 : index
      %c0_56 = arith.constant 0 : index
      %60 = vector.load %arg5[%c0_55, %c0_56] : memref<2x32xf32, #tpu.memory_space<vmem>>, vector<2x32xf32>
      %c0_57 = arith.constant 0 : index
      %c0_58 = arith.constant 0 : index
      %61 = vector.load %arg6[%c0_57, %c0_58] : memref<2x32xf32, #tpu.memory_space<vmem>>, vector<2x32xf32>
      %c0_59 = arith.constant 0 : index
      %c0_60 = arith.constant 0 : index
      %62 = vector.load %arg7[%c0_59, %c0_60] : memref<2x1xf32, #tpu.memory_space<vmem>>, vector<2x1xf32>
      %c0_61 = arith.constant 0 : index
      %c0_62 = arith.constant 0 : index
      %63 = vector.load %arg8[%c0_61, %c0_62] : memref<2x32xf32, #tpu.memory_space<vmem>>, vector<2x32xf32>
      %c0_63 = arith.constant 0 : index
      %c0_64 = arith.constant 0 : index
      %64 = vector.load %arg9[%c0_63, %c0_64] : memref<1x32xf32, #tpu.memory_space<vmem>>, vector<1x32xf32>
      %65 = vector.broadcast %49 : vector<1x32xf32> to vector<2x32xf32>
      %66 = arith.mulf %65, %60 : vector<2x32xf32>
      %cst_65 = arith.constant dense<0.000000e+00> : vector<2xf32>
      %67 = vector.multi_reduction <add>, %66, %cst_65 [1] : vector<2x32xf32> to vector<2xf32>
      %68 = vector.shape_cast %67 : vector<2xf32> to vector<2x1xf32>
      %69 = vector.broadcast %54 : vector<1x32xf32> to vector<2x32xf32>
      %70 = arith.mulf %69, %61 : vector<2x32xf32>
      %cst_66 = arith.constant dense<0.000000e+00> : vector<2xf32>
      %71 = vector.multi_reduction <add>, %70, %cst_66 [1] : vector<2x32xf32> to vector<2xf32>
      %72 = vector.shape_cast %71 : vector<2xf32> to vector<2x1xf32>
      %73 = arith.addf %68, %72 : vector<2x1xf32>
      %74 = arith.addf %73, %62 : vector<2x1xf32>
      %cst_67 = arith.constant 0.000000e+00 : f32
      %75 = vector.broadcast %cst_67 : f32 to vector<2x1xf32>
      %76 = arith.maximumf %74, %75 : vector<2x1xf32>
      %77 = vector.broadcast %76 : vector<2x1xf32> to vector<2x32xf32>
      %78 = arith.mulf %77, %63 : vector<2x32xf32>
      %cst_68 = arith.constant dense<0.000000e+00> : vector<32xf32>
      %79 = vector.multi_reduction <add>, %78, %cst_68 [0] : vector<2x32xf32> to vector<32xf32>
      %80 = vector.shape_cast %79 : vector<32xf32> to vector<1x32xf32>
      %81 = arith.addf %80, %64 : vector<1x32xf32>
      %cst_69 = arith.constant 0.000000e+00 : f32
      %82 = vector.broadcast %cst_69 : f32 to vector<1x32xf32>
      %83 = arith.subf %82, %81 : vector<1x32xf32>
      %84 = math.exp %83 : vector<1x32xf32>
      %cst_70 = arith.constant 1.000000e+00 : f32
      %85 = vector.broadcast %cst_70 : f32 to vector<1x32xf32>
      %86 = arith.addf %85, %84 : vector<1x32xf32>
      %cst_71 = arith.constant 1.000000e+00 : f32
      %87 = vector.broadcast %cst_71 : f32 to vector<1x32xf32>
      %88 = arith.divf %87, %86 : vector<1x32xf32>
      %c0_72 = arith.constant 0 : index
      %c0_73 = arith.constant 0 : index
      %c0_74 = arith.constant 0 : index
      %89 = vector.load %arg10[%c0_72, %c0_73, %c0_74] : memref<1x1x32xf32, #tpu.memory_space<vmem>>, vector<1x1x32xf32>
      %90 = vector.shape_cast %89 : vector<1x1x32xf32> to vector<1x32xf32>
      %91 = vector.shape_cast %88 : vector<1x32xf32> to vector<1x1x32xf32>
      tpu.vector_store %arg10[%c0_72, %c0_73, %c0_74], %91 {strides = array<i32>} : memref<1x1x32xf32, #tpu.memory_space<vmem>>, vector<1x1x32xf32>,
      %92 = vector.broadcast %49 : vector<1x32xf32> to vector<2x32xf32>
      %93 = arith.mulf %92, %60 : vector<2x32xf32>
      %cst_75 = arith.constant dense<0.000000e+00> : vector<2xf32>
      %94 = vector.multi_reduction <add>, %93, %cst_75 [1] : vector<2x32xf32> to vector<2xf32>
      %95 = vector.shape_cast %94 : vector<2xf32> to vector<2x1xf32>
      %96 = vector.broadcast %59 : vector<1x32xf32> to vector<2x32xf32>
      %97 = arith.mulf %96, %61 : vector<2x32xf32>
      %cst_76 = arith.constant dense<0.000000e+00> : vector<2xf32>
      %98 = vector.multi_reduction <add>, %97, %cst_76 [1] : vector<2x32xf32> to vector<2xf32>
      %99 = vector.shape_cast %98 : vector<2xf32> to vector<2x1xf32>
      %100 = arith.addf %95, %99 : vector<2x1xf32>
      %101 = arith.addf %100, %62 : vector<2x1xf32>
      %cst_77 = arith.constant 0.000000e+00 : f32
      %102 = vector.broadcast %cst_77 : f32 to vector<2x1xf32>
      %103 = arith.maximumf %101, %102 : vector<2x1xf32>
      %104 = vector.broadcast %103 : vector<2x1xf32> to vector<2x32xf32>
      %105 = arith.mulf %104, %63 : vector<2x32xf32>
      %cst_78 = arith.constant dense<0.000000e+00> : vector<32xf32>
      %106 = vector.multi_reduction <add>, %105, %cst_78 [0] : vector<2x32xf32> to vector<32xf32>
      %107 = vector.shape_cast %106 : vector<32xf32> to vector<1x32xf32>
      %108 = arith.addf %107, %64 : vector<1x32xf32>
      %cst_79 = arith.constant 0.000000e+00 : f32
      %109 = vector.broadcast %cst_79 : f32 to vector<1x32xf32>
      %110 = arith.subf %109, %108 : vector<1x32xf32>
      %111 = math.exp %110 : vector<1x32xf32>
      %cst_80 = arith.constant 1.000000e+00 : f32
      %112 = vector.broadcast %cst_80 : f32 to vector<1x32xf32>
      %113 = arith.addf %112, %111 : vector<1x32xf32>
      %cst_81 = arith.constant 1.000000e+00 : f32
      %114 = vector.broadcast %cst_81 : f32 to vector<1x32xf32>
      %115 = arith.divf %114, %113 : vector<1x32xf32>
      %c0_82 = arith.constant 0 : index
      %c0_83 = arith.constant 0 : index
      %c0_84 = arith.constant 0 : index
      %116 = vector.load %arg11[%c0_82, %c0_83, %c0_84] : memref<1x1x32xf32, #tpu.memory_space<vmem>>, vector<1x1x32xf32>
      %117 = vector.shape_cast %116 : vector<1x1x32xf32> to vector<1x32xf32>
      %118 = vector.shape_cast %115 : vector<1x32xf32> to vector<1x1x32xf32>
      tpu.vector_store %arg11[%c0_82, %c0_83, %c0_84], %118 {strides = array<i32>} : memref<1x1x32xf32, #tpu.memory_space<vmem>>, vector<1x1x32xf32>,
    } else {
    }
    return
  }
  func.func @transform_0(%arg0: i32, %arg1: i32) -> (i32, i32, i32) {
    %c0_i32 = arith.constant 0 : i32
    %c0_i32_0 = arith.constant 0 : i32
    return %arg0, %arg1, %c0_i32 : i32, i32, i32
  }
  func.func @transform_1(%arg0: i32, %arg1: i32) -> (i32, i32, i32) {
    %c0_i32 = arith.constant 0 : i32
    %c0_i32_0 = arith.constant 0 : i32
    return %arg0, %arg1, %c0_i32 : i32, i32, i32
  }
  func.func @transform_2(%arg0: i32, %arg1: i32) -> (i32, i32, i32) {
    %c0_i32 = arith.constant 0 : i32
    %c0_i32_0 = arith.constant 0 : i32
    return %arg0, %arg1, %c0_i32 : i32, i32, i32
  }
  func.func @transform_3(%arg0: i32, %arg1: i32) -> (i32, i32) {
    %c0_i32 = arith.constant 0 : i32
    %c0_i32_0 = arith.constant 0 : i32
    %c0_i32_1 = arith.constant 0 : i32
    return %c0_i32, %c0_i32_0 : i32, i32
  }
  func.func @transform_4(%arg0: i32, %arg1: i32) -> (i32, i32) {
    %c0_i32 = arith.constant 0 : i32
    %c0_i32_0 = arith.constant 0 : i32
    %c0_i32_1 = arith.constant 0 : i32
    return %c0_i32, %c0_i32_0 : i32, i32
  }
  func.func @transform_5(%arg0: i32, %arg1: i32) -> (i32, i32) {
    %c0_i32 = arith.constant 0 : i32
    %c0_i32_0 = arith.constant 0 : i32
    %c0_i32_1 = arith.constant 0 : i32
    return %c0_i32, %c0_i32_0 : i32, i32
  }
  func.func @transform_6(%arg0: i32, %arg1: i32) -> (i32, i32) {
    %c0_i32 = arith.constant 0 : i32
    %c0_i32_0 = arith.constant 0 : i32
    %c0_i32_1 = arith.constant 0 : i32
    return %c0_i32, %c0_i32_0 : i32, i32
  }
  func.func @transform_7(%arg0: i32, %arg1: i32) -> (i32, i32) {
    %c0_i32 = arith.constant 0 : i32
    %c0_i32_0 = arith.constant 0 : i32
    %c0_i32_1 = arith.constant 0 : i32
    return %c0_i32, %c0_i32_0 : i32, i32
  }
  func.func @transform_8(%arg0: i32, %arg1: i32) -> (i32, i32, i32) {
    %c0_i32 = arith.constant 0 : i32
    %c0_i32_0 = arith.constant 0 : i32
    %c0_i32_1 = arith.constant 0 : i32
    return %arg0, %c0_i32, %c0_i32_0 : i32, i32, i32
  }
  func.func @transform_9(%arg0: i32, %arg1: i32) -> (i32, i32, i32) {
    %c0_i32 = arith.constant 0 : i32
    %c0_i32_0 = arith.constant 0 : i32
    %c0_i32_1 = arith.constant 0 : i32
    return %arg0, %c0_i32, %c0_i32_0 : i32, i32, i32
  }
}

</mosaic_0001>

<llo_original>
// kernel: tpu_custom_call.1
$region0: #{tpu_custom_call.1}
  #allocation0 [shape = 'u32[]', space=smem, size = 0x4, offset = 0x4, fixed_abs, tag = 'smem constant byte address 0x4 - core index']
  #allocation1 [shape = 'u32[72,128]{1,0:T(1,128)}', space=vmem, size = 0x9000, scoped, tag = 'internal scratch']
  #allocation2 [shape = 'f32[1,32]{1,0:T(1,128)}', space=vmem, size = 0x200, scoped, tag = 'scratch operand']
  #allocation3 [shape = 'f32[1,32]{1,0:T(1,128)}', space=vmem, size = 0x200, scoped, tag = 'scratch operand']
  #allocation4 [shape = 'f32[1,32]{1,0:T(1,128)}', space=vmem, size = 0x200, scoped, tag = 'scratch operand']
  #allocation5 [shape = 'f32[1,32]{1,0:T(1,128)}', space=vmem, size = 0x200, scoped, tag = 'scratch operand']
  #allocation6 [shape = 'f32[1,32]{1,0:T(1,128)}', space=vmem, size = 0x200, scoped, tag = 'scratch operand']
  #allocation7 [shape = 'f32[1,32]{1,0:T(1,128)}', space=vmem, size = 0x200, scoped, tag = 'scratch operand']
  %s0 = inlined_call_operand.vmem [shape: bf16[2,256,32], index: 0, kind: input, shape index: {}]
  %s1 = inlined_call_operand.vmem [shape: bf16[2,256,32], index: 1, kind: input, shape index: {}]
  %s2 = inlined_call_operand.vmem [shape: bf16[2,256,32], index: 2, kind: input, shape index: {}]
  %s3 = inlined_call_operand.vmem [shape: f32[2,32], index: 3, kind: input, shape index: {}]
  %s4 = inlined_call_operand.vmem [shape: f32[2,32], index: 4, kind: input, shape index: {}]
  %s5 = inlined_call_operand.vmem [shape: f32[2,1], index: 5, kind: input, shape index: {}]
  %s6 = inlined_call_operand.vmem [shape: f32[2,32], index: 6, kind: input, shape index: {}]
  %s7 = inlined_call_operand.vmem [shape: f32[1,32], index: 7, kind: input, shape index: {}]
  %s8 = inlined_call_operand.hbm [shape: f32[2,1,32], index: 8, kind: output, shape index: {0}]
  %s9 = inlined_call_operand.hbm [shape: f32[2,1,32], index: 9, kind: output, shape index: {1}]
  %10 = xla_tuple %s8, %s9
  %s11 = sld [smem:[#allocation0]]
  $region81: #{tpu_custom_call.1} parent=0
    _
  %s13 = ssub.s32 1, %s11
  %s14 = scalar_select 0, %s13, %s11
  $region1: #{tpu_custom_call.1} parent=0
    #allocation8 [shape = 'u8[1024]{0}', space=vmem, size = 0x400, scoped, tag = 'output window, operand 0']
    #allocation9 [shape = 's32[2]{0}', space=sflag, size = 0x8, scoped, tag = 'scoped memory for tpu_custom_call.1']
    #allocation10 [shape = 'u8[1024]{0}', space=vmem, size = 0x400, scoped, tag = 'output window, operand 1']
    #allocation11 [shape = 's32[2]{0}', space=sflag, size = 0x8, scoped, tag = 'scoped memory for tpu_custom_call.1']
    %15 = vsyncpa [#allocation9], 0
    %s16 = scalar_lea.sflag [#allocation9], 1
    %17 = vsyncpa %s16, 0
    %18 = vsyncpa [#allocation11], 0
    %s19 = scalar_lea.sflag [#allocation11], 1
    %20 = vsyncpa %s19, 0
    loop: start=0, step=1, limit=4
    $region2: #{tpu_custom_call.1} parent=1 // loop_pre_header
      _
    $region3: #{tpu_custom_call.1} parent=1 // loop_header
      %s22 = sphi 0, %s26
      %p23 = scmp.ge.s32.totalorder %s22, 4
      %s29 = sphi 0, %s41
      %s30 = sphi 0, %s37
      %s31 = sphi 0, %s29
      %s32 = sphi 0, %s30
      %s33 = sphi 0, %s31
      %s34 = sphi 0, %s32
      %s46 = sphi 0, %s48
      %s49 = sphi 0, %s46
      %s50 = sphi 0, %s49
      %s66 = sphi 0, %s50
      %s74 = sphi 0, %s76
      %s77 = sphi 0, %s74
      %s78 = sphi 0, %s77
      %s94 = sphi 0, %s78
      %s102 = sphi 0, %s104
      %s105 = sphi 0, %s102
      %s106 = sphi 0, %s105
      %s122 = sphi 0, %s106
      %s126 = sphi 0, %s126
      %s128 = sphi 0, %s126
      %s129 = sphi 0, %s128
      %s143 = sphi 0, %s129
      %s147 = sphi 0, %s147
      %s149 = sphi 0, %s147
      %s150 = sphi 0, %s149
      %s164 = sphi 0, %s150
      %s168 = sphi 0, %s168
      %s170 = sphi 0, %s168
      %s171 = sphi 0, %s170
      %s185 = sphi 0, %s171
      %s189 = sphi 0, %s189
      %s191 = sphi 0, %s189
      %s192 = sphi 0, %s191
      %s206 = sphi 0, %s192
      %s210 = sphi 0, %s210
      %s212 = sphi 0, %s210
      %s213 = sphi 0, %s212
      %s227 = sphi 0, %s213
      %s233 = sphi 0, %s235
      %s236 = sphi 0, %s233
      %s237 = sphi 0, %s236
      %s253 = sphi 0, %s237
      %s259 = sphi 0, %s261
      %s262 = sphi 0, %s259
      %s263 = sphi 0, %s262
      %s279 = sphi 0, %s263
    $region4: #{tpu_custom_call.1} parent=1 // loop_header_branch
      %25 = sbr.rel (%p23) target = $region8
    $region5: #{tpu_custom_call.1} parent=1 // loop_body
      %s27 = ssub.s32 %s22, 1
      %s28 = ssub.s32 %s22, 2
      %s35 = sadd.s32 1, %s30
      %p36 = scmp.ge.s32.totalorder %s35, 1
      %s37 = scalar_select %p36, 0, %s35
      %s38 = sadd.s32 1, %s29
      %s39 = scalar_select %p36, %s38, %s29
      %p40 = scmp.ge.s32.totalorder %s39, 2
      %s41 = scalar_select %p40, 0, %s39
      %s42 = ssub.s32 %s29, %s41
      %s43 = ssub.s32 %s30, %s37
      %s44 = sor.u32 %s42, %s43
      %p45 = scmp.eq.s32.totalorder %s44, 0
      %s47 = sadd.s32 %s46, 1
      %s48 = scalar_select %p45, %s46, %s47
      %p51 = pneg %p45
      %p52 = scmp.eq.s32.totalorder %s22, 1
      %p53 = por %p51, %p52
      %p54 = scmp.ne.s32.totalorder %s46, %s49
      %p55 = scmp.eq.s32.totalorder %s22, 0
      %p56 = por %p54, %p55
      %p57 = scmp.ne.s32.totalorder %s46, %s49
      %p58 = scmp.eq.s32.totalorder %s27, 1
      %p59 = por %p57, %p58
      %p60 = scmp.ne.s32.totalorder %s49, %s50
      %p61 = scmp.eq.s32.totalorder %s27, 0
      %p62 = por %p60, %p61
      %p63 = scmp.ne.s32.totalorder %s49, %s50
      %p64 = scmp.eq.s32.totalorder %s28, 1
      %p65 = por %p63, %p64
      %p67 = scmp.ne.s32.totalorder %s50, %s66
      %p68 = scmp.eq.s32.totalorder %s28, 0
      %p69 = por %p67, %p68
      %s70 = ssub.s32 %s29, %s41
      %s71 = ssub.s32 %s30, %s37
      %s72 = sor.u32 %s70, %s71
      %p73 = scmp.eq.s32.totalorder %s72, 0
      %s75 = sadd.s32 %s74, 1
      %s76 = scalar_select %p73, %s74, %s75
      %p79 = pneg %p73
      %p80 = scmp.eq.s32.totalorder %s22, 1
      %p81 = por %p79, %p80
      %p82 = scmp.ne.s32.totalorder %s74, %s77
      %p83 = scmp.eq.s32.totalorder %s22, 0
      %p84 = por %p82, %p83
      %p85 = scmp.ne.s32.totalorder %s74, %s77
      %p86 = scmp.eq.s32.totalorder %s27, 1
      %p87 = por %p85, %p86
      %p88 = scmp.ne.s32.totalorder %s77, %s78
      %p89 = scmp.eq.s32.totalorder %s27, 0
      %p90 = por %p88, %p89
      %p91 = scmp.ne.s32.totalorder %s77, %s78
      %p92 = scmp.eq.s32.totalorder %s28, 1
      %p93 = por %p91, %p92
      %p95 = scmp.ne.s32.totalorder %s78, %s94
      %p96 = scmp.eq.s32.totalorder %s28, 0
      %p97 = por %p95, %p96
      %s98 = ssub.s32 %s29, %s41
      %s99 = ssub.s32 %s30, %s37
      %s100 = sor.u32 %s98, %s99
      %p101 = scmp.eq.s32.totalorder %s100, 0
      %s103 = sadd.s32 %s102, 1
      %s104 = scalar_select %p101, %s102, %s103
      %p107 = pneg %p101
      %p108 = scmp.eq.s32.totalorder %s22, 1
      %p109 = por %p107, %p108
      %p110 = scmp.ne.s32.totalorder %s102, %s105
      %p111 = scmp.eq.s32.totalorder %s22, 0
      %p112 = por %p110, %p111
      %p113 = scmp.ne.s32.totalorder %s102, %s105
      %p114 = scmp.eq.s32.totalorder %s27, 1
      %p115 = por %p113, %p114
      %p116 = scmp.ne.s32.totalorder %s105, %s106
      %p117 = scmp.eq.s32.totalorder %s27, 0
      %p118 = por %p116, %p117
      %p119 = scmp.ne.s32.totalorder %s105, %s106
      %p120 = scmp.eq.s32.totalorder %s28, 1
      %p121 = por %p119, %p120
      %p123 = scmp.ne.s32.totalorder %s106, %s122
      %p124 = scmp.eq.s32.totalorder %s28, 0
      %p125 = por %p123, %p124
      %s127 = sadd.s32 %s126, 1
      %p130 = scmp.eq.s32.totalorder %s22, 1
      %p131 = scmp.ne.s32.totalorder %s126, %s128
      %p132 = scmp.eq.s32.totalorder %s22, 0
      %p133 = por %p131, %p132
      %p134 = scmp.ne.s32.totalorder %s126, %s128
      %p135 = scmp.eq.s32.totalorder %s27, 1
      %p136 = por %p134, %p135
      %p137 = scmp.ne.s32.totalorder %s128, %s129
      %p138 = scmp.eq.s32.totalorder %s27, 0
      %p139 = por %p137, %p138
      %p140 = scmp.ne.s32.totalorder %s128, %s129
      %p141 = scmp.eq.s32.totalorder %s28, 1
      %p142 = por %p140, %p141
      %p144 = scmp.ne.s32.totalorder %s129, %s143
      %p145 = scmp.eq.s32.totalorder %s28, 0
      %p146 = por %p144, %p145
      %s148 = sadd.s32 %s147, 1
      %p151 = scmp.eq.s32.totalorder %s22, 1
      %p152 = scmp.ne.s32.totalorder %s147, %s149
      %p153 = scmp.eq.s32.totalorder %s22, 0
      %p154 = por %p152, %p153
      %p155 = scmp.ne.s32.totalorder %s147, %s149
      %p156 = scmp.eq.s32.totalorder %s27, 1
      %p157 = por %p155, %p156
      %p158 = scmp.ne.s32.totalorder %s149, %s150
      %p159 = scmp.eq.s32.totalorder %s27, 0
      %p160 = por %p158, %p159
      %p161 = scmp.ne.s32.totalorder %s149, %s150
      %p162 = scmp.eq.s32.totalorder %s28, 1
      %p163 = por %p161, %p162
      %p165 = scmp.ne.s32.totalorder %s150, %s164
      %p166 = scmp.eq.s32.totalorder %s28, 0
      %p167 = por %p165, %p166
      %s169 = sadd.s32 %s168, 1
      %p172 = scmp.eq.s32.totalorder %s22, 1
      %p173 = scmp.ne.s32.totalorder %s168, %s170
      %p174 = scmp.eq.s32.totalorder %s22, 0
      %p175 = por %p173, %p174
      %p176 = scmp.ne.s32.totalorder %s168, %s170
      %p177 = scmp.eq.s32.totalorder %s27, 1
      %p178 = por %p176, %p177
      %p179 = scmp.ne.s32.totalorder %s170, %s171
      %p180 = scmp.eq.s32.totalorder %s27, 0
      %p181 = por %p179, %p180
      %p182 = scmp.ne.s32.totalorder %s170, %s171
      %p183 = scmp.eq.s32.totalorder %s28, 1
      %p184 = por %p182, %p183
      %p186 = scmp.ne.s32.totalorder %s171, %s185
      %p187 = scmp.eq.s32.totalorder %s28, 0
      %p188 = por %p186, %p187
      %s190 = sadd.s32 %s189, 1
      %p193 = scmp.eq.s32.totalorder %s22, 1
      %p194 = scmp.ne.s32.totalorder %s189, %s191
      %p195 = scmp.eq.s32.totalorder %s22, 0
      %p196 = por %p194, %p195
      %p197 = scmp.ne.s32.totalorder %s189, %s191
      %p198 = scmp.eq.s32.totalorder %s27, 1
      %p199 = por %p197, %p198
      %p200 = scmp.ne.s32.totalorder %s191, %s192
      %p201 = scmp.eq.s32.totalorder %s27, 0
      %p202 = por %p200, %p201
      %p203 = scmp.ne.s32.totalorder %s191, %s192
      %p204 = scmp.eq.s32.totalorder %s28, 1
      %p205 = por %p203, %p204
      %p207 = scmp.ne.s32.totalorder %s192, %s206
      %p208 = scmp.eq.s32.totalorder %s28, 0
      %p209 = por %p207, %p208
      %s211 = sadd.s32 %s210, 1
      %p214 = scmp.eq.s32.totalorder %s22, 1
      %p215 = scmp.ne.s32.totalorder %s210, %s212
      %p216 = scmp.eq.s32.totalorder %s22, 0
      %p217 = por %p215, %p216
      %p218 = scmp.ne.s32.totalorder %s210, %s212
      %p219 = scmp.eq.s32.totalorder %s27, 1
      %p220 = por %p218, %p219
      %p221 = scmp.ne.s32.totalorder %s212, %s213
      %p222 = scmp.eq.s32.totalorder %s27, 0
      %p223 = por %p221, %p222
      %p224 = scmp.ne.s32.totalorder %s212, %s213
      %p225 = scmp.eq.s32.totalorder %s28, 1
      %p226 = por %p224, %p225
      %p228 = scmp.ne.s32.totalorder %s213, %s227
      %p229 = scmp.eq.s32.totalorder %s28, 0
      %p230 = por %p228, %p229
      %s231 = ssub.s32 %s29, %s41
      %p232 = scmp.eq.s32.totalorder %s231, 0
      %s234 = sadd.s32 %s233, 1
      %s235 = scalar_select %p232, %s233, %s234
      %p238 = pneg %p232
      %p239 = scmp.eq.s32.totalorder %s22, 1
      %p240 = por %p238, %p239
      %p241 = scmp.ne.s32.totalorder %s233, %s236
      %p242 = scmp.eq.s32.totalorder %s22, 0
      %p243 = por %p241, %p242
      %p244 = scmp.ne.s32.totalorder %s233, %s236
      %p245 = scmp.eq.s32.totalorder %s27, 1
      %p246 = por %p244, %p245
      %p247 = scmp.ne.s32.totalorder %s236, %s237
      %p248 = scmp.eq.s32.totalorder %s27, 0
      %p249 = por %p247, %p248
      %p250 = scmp.ne.s32.totalorder %s236, %s237
      %p251 = scmp.eq.s32.totalorder %s28, 1
      %p252 = por %p250, %p251
      %p254 = scmp.ne.s32.totalorder %s237, %s253
      %p255 = scmp.eq.s32.totalorder %s28, 0
      %p256 = por %p254, %p255
      %s257 = ssub.s32 %s29, %s41
      %p258 = scmp.eq.s32.totalorder %s257, 0
      %s260 = sadd.s32 %s259, 1
      %s261 = scalar_select %p258, %s259, %s260
      %p264 = pneg %p258
      %p265 = scmp.eq.s32.totalorder %s22, 1
      %p266 = por %p264, %p265
      %p267 = scmp.ne.s32.totalorder %s259, %s262
      %p268 = scmp.eq.s32.totalorder %s22, 0
      %p269 = por %p267, %p268
      %p270 = scmp.ne.s32.totalorder %s259, %s262
      %p271 = scmp.eq.s32.totalorder %s27, 1
      %p272 = por %p270, %p271
      %p273 = scmp.ne.s32.totalorder %s262, %s263
      %p274 = scmp.eq.s32.totalorder %s27, 0
      %p275 = por %p273, %p274
      %p276 = scmp.ne.s32.totalorder %s262, %s263
      %p277 = scmp.eq.s32.totalorder %s28, 1
      %p278 = por %p276, %p277
      %p280 = scmp.ne.s32.totalorder %s263, %s279
      %p281 = scmp.eq.s32.totalorder %s28, 0
      %p282 = por %p280, %p281
      %p283 = scmp.le.s32.totalorder 1, %s22
      %p284 = scmp.lt.s32.totalorder %s22, 3
      %p285 = pnand %p283, %p284
      %p286 = pneg %p285
      // Predicated region
      $region9: #{tpu_custom_call.1} parent=5 // pred_check
        _
      $region10: #{tpu_custom_call.1} parent=5 // pred_check_branch
        %288 = sbr.rel (%p285) target = $region12
      $region11: #{tpu_custom_call.1} parent=5 // pred_region
        %s289 = ssub.s32 %s22, 1
        // Predicated region
        $region13: #{tpu_custom_call.1} parent=11 // pred_check
          %p290 = pneg %p139
        $region14: #{tpu_custom_call.1} parent=11 // pred_check_branch
          %292 = sbr.rel (%p290) target = $region16
        $region15: #{tpu_custom_call.1} parent=11 // pred_region
          _
        $region16: #{tpu_custom_call.1} parent=11 // pred_fallthru
          _
        // Predicated region
        $region17: #{tpu_custom_call.1} parent=11 // pred_check
          %p293 = pneg %p160
        $region18: #{tpu_custom_call.1} parent=11 // pred_check_branch
          %295 = sbr.rel (%p293) target = $region20
        $region19: #{tpu_custom_call.1} parent=11 // pred_region
          _
        $region20: #{tpu_custom_call.1} parent=11 // pred_fallthru
          _
        // Predicated region
        $region21: #{tpu_custom_call.1} parent=11 // pred_check
          %p296 = pneg %p181
        $region22: #{tpu_custom_call.1} parent=11 // pred_check_branch
          %298 = sbr.rel (%p296) target = $region24
        $region23: #{tpu_custom_call.1} parent=11 // pred_region
          _
        $region24: #{tpu_custom_call.1} parent=11 // pred_fallthru
          _
        // Predicated region
        $region25: #{tpu_custom_call.1} parent=11 // pred_check
          %p299 = pneg %p202
        $region26: #{tpu_custom_call.1} parent=11 // pred_check_branch
          %301 = sbr.rel (%p299) target = $region28
        $region27: #{tpu_custom_call.1} parent=11 // pred_region
          _
        $region28: #{tpu_custom_call.1} parent=11 // pred_fallthru
          _
        // Predicated region
        $region29: #{tpu_custom_call.1} parent=11 // pred_check
          %p302 = pneg %p223
        $region30: #{tpu_custom_call.1} parent=11 // pred_check_branch
          %304 = sbr.rel (%p302) target = $region32
        $region31: #{tpu_custom_call.1} parent=11 // pred_region
          _
        $region32: #{tpu_custom_call.1} parent=11 // pred_fallthru
          _
      $region12: #{tpu_custom_call.1} parent=5 // pred_fallthru
        _
      %p305 = scmp.lt.s32.totalorder %s22, 2
      // Predicated region
      $region33: #{tpu_custom_call.1} parent=5 // pred_check
        %p306 = pneg %p305
      $region34: #{tpu_custom_call.1} parent=5 // pred_check_branch
        %308 = sbr.rel (%p306) target = $region36
      $region35: #{tpu_custom_call.1} parent=5 // pred_region
        // Predicated region
        $region37: #{tpu_custom_call.1} parent=35 // pred_check
          %p309 = pneg %p56
        $region38: #{tpu_custom_call.1} parent=35 // pred_check_branch
          %311 = sbr.rel (%p309) target = $region40
        $region39: #{tpu_custom_call.1} parent=35 // pred_region
          %s312 = smul.u32 32, %s30
          %p313 = scmp.lt.s32.totalorder %s29, 1
          %s314 = scalar_select %p313, %s29, 1
          %p315 = scmp.lt.s32.totalorder %s312, 31
          %s316 = scalar_select %p315, %s312, 31
          %s317 = smul.addr %s314, 32
          %s318 = sadd.s32 %s316, %s317
          %s319 = smul.addr %s318, 4
          %s320 = scalar_lea.vmem %s0, %s319
          %s321 = smul.u32 32, %s30
        $region40: #{tpu_custom_call.1} parent=35 // pred_fallthru
          _
        // Predicated region
        $region41: #{tpu_custom_call.1} parent=35 // pred_check
          %p322 = pneg %p84
        $region42: #{tpu_custom_call.1} parent=35 // pred_check_branch
          %324 = sbr.rel (%p322) target = $region44
        $region43: #{tpu_custom_call.1} parent=35 // pred_region
          %s325 = smul.u32 32, %s30
          %p326 = scmp.lt.s32.totalorder %s29, 1
          %s327 = scalar_select %p326, %s29, 1
          %p328 = scmp.lt.s32.totalorder %s325, 31
          %s329 = scalar_select %p328, %s325, 31
          %s330 = smul.addr %s327, 32
          %s331 = sadd.s32 %s329, %s330
          %s332 = smul.addr %s331, 4
          %s333 = scalar_lea.vmem %s1, %s332
          %s334 = smul.u32 32, %s30
        $region44: #{tpu_custom_call.1} parent=35 // pred_fallthru
          _
        // Predicated region
        $region45: #{tpu_custom_call.1} parent=35 // pred_check
          %p335 = pneg %p112
        $region46: #{tpu_custom_call.1} parent=35 // pred_check_branch
          %337 = sbr.rel (%p335) target = $region48
        $region47: #{tpu_custom_call.1} parent=35 // pred_region
          %s338 = smul.u32 32, %s30
          %p339 = scmp.lt.s32.totalorder %s29, 1
          %s340 = scalar_select %p339, %s29, 1
          %p341 = scmp.lt.s32.totalorder %s338, 31
          %s342 = scalar_select %p341, %s338, 31
          %s343 = smul.addr %s340, 32
          %s344 = sadd.s32 %s342, %s343
          %s345 = smul.addr %s344, 4
          %s346 = scalar_lea.vmem %s2, %s345
          %s347 = smul.u32 32, %s30
        $region48: #{tpu_custom_call.1} parent=35 // pred_fallthru
          _
      $region36: #{tpu_custom_call.1} parent=5 // pred_fallthru
        _
      %p348 = scmp.le.s32.totalorder 1, %s22
      %p349 = scmp.lt.s32.totalorder %s22, 3
      %p350 = pnand %p348, %p349
      %p351 = pneg %p350
      // Predicated region
      $region49: #{tpu_custom_call.1} parent=5 // pred_check
        _
      $region50: #{tpu_custom_call.1} parent=5 // pred_check_branch
        %353 = sbr.rel (%p350) target = $region52
      $region51: #{tpu_custom_call.1} parent=5 // pred_region
        %s354 = ssub.s32 %s22, 1
        %s355 = smul.u32 32, %s32
        %p356 = scmp.lt.s32.totalorder %s31, 1
        %s357 = scalar_select %p356, %s31, 1
        %p358 = scmp.lt.s32.totalorder %s355, 31
        %s359 = scalar_select %p358, %s355, 31
        %s360 = smul.addr %s357, 32
        %s361 = sadd.s32 %s359, %s360
        %s362 = smul.addr %s361, 4
        %s363 = scalar_lea.vmem %s0, %s362
        %p364 = pneg %p62
        %p365 = pneg %p59
        %s366 = smul.u32 32, %s32
        %p367 = scmp.lt.s32.totalorder %s31, 1
        %s368 = scalar_select %p367, %s31, 1
        %p369 = scmp.lt.s32.totalorder %s366, 31
        %s370 = scalar_select %p369, %s366, 31
        %s371 = smul.addr %s368, 32
        %s372 = sadd.s32 %s370, %s371
        %s373 = smul.addr %s372, 4
        %s374 = scalar_lea.vmem %s1, %s373
        %p375 = pneg %p90
        %p376 = pneg %p87
        %s377 = smul.u32 32, %s32
        %p378 = scmp.lt.s32.totalorder %s31, 1
        %s379 = scalar_select %p378, %s31, 1
        %p380 = scmp.lt.s32.totalorder %s377, 31
        %s381 = scalar_select %p380, %s377, 31
        %s382 = smul.addr %s379, 32
        %s383 = sadd.s32 %s381, %s382
        %s384 = smul.addr %s383, 4
        %s385 = scalar_lea.vmem %s2, %s384
        %p386 = pneg %p118
        %p387 = pneg %p115
        %p388 = pneg %p139
        %p389 = pneg %p136
        %p390 = pneg %p160
        %p391 = pneg %p157
        %p392 = pneg %p181
        %p393 = pneg %p178
        %p394 = pneg %p202
        %p395 = pneg %p199
        %p396 = pneg %p223
        %p397 = pneg %p220
        %p398 = pneg %p249
        %p399 = pneg %p246
        %s400 = sand.u32 %s236, 1
        %s401 = scalar_lea.sflag [#allocation9], %s400
        %s402 = sand.u32 %s236, 1
        %s403 = scalar_lea.vmem [#allocation8], %s402
        %p404 = pneg %p275
        %p405 = pneg %p272
        %s406 = sand.u32 %s262, 1
        %s407 = scalar_lea.sflag [#allocation11], %s406
        %s408 = sand.u32 %s262, 1
        %s409 = scalar_lea.vmem [#allocation10], %s408
        %s410 = smul.u32 32, %s32
        %p411 = scmp.lt.s32.totalorder %s31, 1
        %s412 = scalar_select %p411, %s31, 1
        %p413 = scmp.lt.s32.totalorder %s410, 31
        %s414 = scalar_select %p413, %s410, 31
        %s415 = smul.addr %s412, 32
        %s416 = sadd.s32 %s414, %s415
        %s417 = smul.addr %s416, 4
        %s418 = scalar_lea.vmem %s0, %s417
        %s419 = smul.u32 32, %s32
        %s420 = smul.u32 32, %s32
        %p421 = scmp.lt.s32.totalorder %s31, 1
        %s422 = scalar_select %p421, %s31, 1
        %p423 = scmp.lt.s32.totalorder %s420, 31
        %s424 = scalar_select %p423, %s420, 31
        %s425 = smul.addr %s422, 32
        %s426 = sadd.s32 %s424, %s425
        %s427 = smul.addr %s426, 4
        %s428 = scalar_lea.vmem %s1, %s427
        %s429 = smul.u32 32, %s32
        %s430 = smul.u32 32, %s32
        %p431 = scmp.lt.s32.totalorder %s31, 1
        %s432 = scalar_select %p431, %s31, 1
        %p433 = scmp.lt.s32.totalorder %s430, 31
        %s434 = scalar_select %p433, %s430, 31
        %s435 = smul.addr %s432, 32
        %s436 = sadd.s32 %s434, %s435
        %s437 = smul.addr %s436, 4
        %s438 = scalar_lea.vmem %s2, %s437
        %s439 = smul.u32 32, %s32
        %v440 = vld [vmem:[%s418] sm:$0xf]
        %v441 = vld [vmem:[%s418 + $0x4] sm:$0xf]
        %v442 = vld [vmem:[%s418 + $0x8] sm:$0xf]
        %v443 = vld [vmem:[%s418 + $0xc] sm:$0xf]
        %v444 = vld [vmem:[%s418 + $0x10] sm:$0xf]
        %v445 = vld [vmem:[%s418 + $0x14] sm:$0xf]
        %v446 = vld [vmem:[%s418 + $0x18] sm:$0xf]
        %v447 = vld [vmem:[%s418 + $0x1c] sm:$0xf]
        %v448 = vld [vmem:[%s418 + $0x20] sm:$0xf]
        %v449 = vld [vmem:[%s418 + $0x24] sm:$0xf]
        %v450 = vld [vmem:[%s418 + $0x28] sm:$0xf]
        %v451 = vld [vmem:[%s418 + $0x2c] sm:$0xf]
        %v452 = vld [vmem:[%s418 + $0x30] sm:$0xf]
        %v453 = vld [vmem:[%s418 + $0x34] sm:$0xf]
        %v454 = vld [vmem:[%s418 + $0x38] sm:$0xf]
        %v455 = vld [vmem:[%s418 + $0x3c] sm:$0xf]
        %v456 = vld [vmem:[%s418 + $0x40] sm:$0xf]
        %v457 = vld [vmem:[%s418 + $0x44] sm:$0xf]
        %v458 = vld [vmem:[%s418 + $0x48] sm:$0xf]
        %v459 = vld [vmem:[%s418 + $0x4c] sm:$0xf]
        %v460 = vld [vmem:[%s418 + $0x50] sm:$0xf]
        %v461 = vld [vmem:[%s418 + $0x54] sm:$0xf]
        %v462 = vld [vmem:[%s418 + $0x58] sm:$0xf]
        %v463 = vld [vmem:[%s418 + $0x5c] sm:$0xf]
        %v464 = vld [vmem:[%s418 + $0x60] sm:$0xf]
        %v465 = vld [vmem:[%s418 + $0x64] sm:$0xf]
        %v466 = vld [vmem:[%s418 + $0x68] sm:$0xf]
        %v467 = vld [vmem:[%s418 + $0x6c] sm:$0xf]
        %v468 = vld [vmem:[%s418 + $0x70] sm:$0xf]
        %v469 = vld [vmem:[%s418 + $0x74] sm:$0xf]
        %v470 = vld [vmem:[%s418 + $0x78] sm:$0xf]
        %v471 = vld [vmem:[%s418 + $0x7c] sm:$0xf]
        %v472 = vunpack.c.l.bf16 %v440
        %v473 = vunpack.c.l.bf16 %v441
        %v474 = vunpack.c.l.bf16 %v442
        %v475 = vunpack.c.l.bf16 %v443
        %v476 = vunpack.c.l.bf16 %v444
        %v477 = vunpack.c.l.bf16 %v445
        %v478 = vunpack.c.l.bf16 %v446
        %v479 = vunpack.c.l.bf16 %v447
        %v480 = vunpack.c.l.bf16 %v448
        %v481 = vunpack.c.l.bf16 %v449
        %v482 = vunpack.c.l.bf16 %v450
        %v483 = vunpack.c.l.bf16 %v451
        %v484 = vunpack.c.l.bf16 %v452
        %v485 = vunpack.c.l.bf16 %v453
        %v486 = vunpack.c.l.bf16 %v454
        %v487 = vunpack.c.l.bf16 %v455
        %v488 = vunpack.c.l.bf16 %v456
        %v489 = vunpack.c.l.bf16 %v457
        %v490 = vunpack.c.l.bf16 %v458
        %v491 = vunpack.c.l.bf16 %v459
        %v492 = vunpack.c.l.bf16 %v460
        %v493 = vunpack.c.l.bf16 %v461
        %v494 = vunpack.c.l.bf16 %v462
        %v495 = vunpack.c.l.bf16 %v463
        %v496 = vunpack.c.l.bf16 %v464
        %v497 = vunpack.c.l.bf16 %v465
        %v498 = vunpack.c.l.bf16 %v466
        %v499 = vunpack.c.l.bf16 %v467
        %v500 = vunpack.c.l.bf16 %v468
        %v501 = vunpack.c.l.bf16 %v469
        %v502 = vunpack.c.l.bf16 %v470
        %v503 = vunpack.c.l.bf16 %v471
        %v504 = vld [vmem:[%s428] sm:$0xf]
        %v505 = vld [vmem:[%s428 + $0x4] sm:$0xf]
        %v506 = vld [vmem:[%s428 + $0x8] sm:$0xf]
        %v507 = vld [vmem:[%s428 + $0xc] sm:$0xf]
        %v508 = vld [vmem:[%s428 + $0x10] sm:$0xf]
        %v509 = vld [vmem:[%s428 + $0x14] sm:$0xf]
        %v510 = vld [vmem:[%s428 + $0x18] sm:$0xf]
        %v511 = vld [vmem:[%s428 + $0x1c] sm:$0xf]
        %v512 = vld [vmem:[%s428 + $0x20] sm:$0xf]
        %v513 = vld [vmem:[%s428 + $0x24] sm:$0xf]
        %v514 = vld [vmem:[%s428 + $0x28] sm:$0xf]
        %v515 = vld [vmem:[%s428 + $0x2c] sm:$0xf]
        %v516 = vld [vmem:[%s428 + $0x30] sm:$0xf]
        %v517 = vld [vmem:[%s428 + $0x34] sm:$0xf]
        %v518 = vld [vmem:[%s428 + $0x38] sm:$0xf]
        %v519 = vld [vmem:[%s428 + $0x3c] sm:$0xf]
        %v520 = vld [vmem:[%s428 + $0x40] sm:$0xf]
        %v521 = vld [vmem:[%s428 + $0x44] sm:$0xf]
        %v522 = vld [vmem:[%s428 + $0x48] sm:$0xf]
        %v523 = vld [vmem:[%s428 + $0x4c] sm:$0xf]
        %v524 = vld [vmem:[%s428 + $0x50] sm:$0xf]
        %v525 = vld [vmem:[%s428 + $0x54] sm:$0xf]
        %v526 = vld [vmem:[%s428 + $0x58] sm:$0xf]
        %v527 = vld [vmem:[%s428 + $0x5c] sm:$0xf]
        %v528 = vld [vmem:[%s428 + $0x60] sm:$0xf]
        %v529 = vld [vmem:[%s428 + $0x64] sm:$0xf]
        %v530 = vld [vmem:[%s428 + $0x68] sm:$0xf]
        %v531 = vld [vmem:[%s428 + $0x6c] sm:$0xf]
        %v532 = vld [vmem:[%s428 + $0x70] sm:$0xf]
        %v533 = vld [vmem:[%s428 + $0x74] sm:$0xf]
        %v534 = vld [vmem:[%s428 + $0x78] sm:$0xf]
        %v535 = vld [vmem:[%s428 + $0x7c] sm:$0xf]
        %v536 = vunpack.c.l.bf16 %v504
        %v537 = vunpack.c.l.bf16 %v505
        %v538 = vunpack.c.l.bf16 %v506
        %v539 = vunpack.c.l.bf16 %v507
        %v540 = vunpack.c.l.bf16 %v508
        %v541 = vunpack.c.l.bf16 %v509
        %v542 = vunpack.c.l.bf16 %v510
        %v543 = vunpack.c.l.bf16 %v511
        %v544 = vunpack.c.l.bf16 %v512
        %v545 = vunpack.c.l.bf16 %v513
        %v546 = vunpack.c.l.bf16 %v514
        %v547 = vunpack.c.l.bf16 %v515
        %v548 = vunpack.c.l.bf16 %v516
        %v549 = vunpack.c.l.bf16 %v517
        %v550 = vunpack.c.l.bf16 %v518
        %v551 = vunpack.c.l.bf16 %v519
        %v552 = vunpack.c.l.bf16 %v520
        %v553 = vunpack.c.l.bf16 %v521
        %v554 = vunpack.c.l.bf16 %v522
        %v555 = vunpack.c.l.bf16 %v523
        %v556 = vunpack.c.l.bf16 %v524
        %v557 = vunpack.c.l.bf16 %v525
        %v558 = vunpack.c.l.bf16 %v526
        %v559 = vunpack.c.l.bf16 %v527
        %v560 = vunpack.c.l.bf16 %v528
        %v561 = vunpack.c.l.bf16 %v529
        %v562 = vunpack.c.l.bf16 %v530
        %v563 = vunpack.c.l.bf16 %v531
        %v564 = vunpack.c.l.bf16 %v532
        %v565 = vunpack.c.l.bf16 %v533
        %v566 = vunpack.c.l.bf16 %v534
        %v567 = vunpack.c.l.bf16 %v535
        %v568 = vld [vmem:[%s438] sm:$0xf]
        %v569 = vld [vmem:[%s438 + $0x4] sm:$0xf]
        %v570 = vld [vmem:[%s438 + $0x8] sm:$0xf]
        %v571 = vld [vmem:[%s438 + $0xc] sm:$0xf]
        %v572 = vld [vmem:[%s438 + $0x10] sm:$0xf]
        %v573 = vld [vmem:[%s438 + $0x14] sm:$0xf]
        %v574 = vld [vmem:[%s438 + $0x18] sm:$0xf]
        %v575 = vld [vmem:[%s438 + $0x1c] sm:$0xf]
        %v576 = vld [vmem:[%s438 + $0x20] sm:$0xf]
        %v577 = vld [vmem:[%s438 + $0x24] sm:$0xf]
        %v578 = vld [vmem:[%s438 + $0x28] sm:$0xf]
        %v579 = vld [vmem:[%s438 + $0x2c] sm:$0xf]
        %v580 = vld [vmem:[%s438 + $0x30] sm:$0xf]
        %v581 = vld [vmem:[%s438 + $0x34] sm:$0xf]
        %v582 = vld [vmem:[%s438 + $0x38] sm:$0xf]
        %v583 = vld [vmem:[%s438 + $0x3c] sm:$0xf]
        %v584 = vld [vmem:[%s438 + $0x40] sm:$0xf]
        %v585 = vld [vmem:[%s438 + $0x44] sm:$0xf]
        %v586 = vld [vmem:[%s438 + $0x48] sm:$0xf]
        %v587 = vld [vmem:[%s438 + $0x4c] sm:$0xf]
        %v588 = vld [vmem:[%s438 + $0x50] sm:$0xf]
        %v589 = vld [vmem:[%s438 + $0x54] sm:$0xf]
        %v590 = vld [vmem:[%s438 + $0x58] sm:$0xf]
        %v591 = vld [vmem:[%s438 + $0x5c] sm:$0xf]
        %v592 = vld [vmem:[%s438 + $0x60] sm:$0xf]
        %v593 = vld [vmem:[%s438 + $0x64] sm:$0xf]
        %v594 = vld [vmem:[%s438 + $0x68] sm:$0xf]
        %v595 = vld [vmem:[%s438 + $0x6c] sm:$0xf]
        %v596 = vld [vmem:[%s438 + $0x70] sm:$0xf]
        %v597 = vld [vmem:[%s438 + $0x74] sm:$0xf]
        %v598 = vld [vmem:[%s438 + $0x78] sm:$0xf]
        %v599 = vld [vmem:[%s438 + $0x7c] sm:$0xf]
        %v600 = vunpack.c.l.bf16 %v568
        %v601 = vunpack.c.l.bf16 %v569
        %v602 = vunpack.c.l.bf16 %v570
        %v603 = vunpack.c.l.bf16 %v571
        %v604 = vunpack.c.l.bf16 %v572
        %v605 = vunpack.c.l.bf16 %v573
        %v606 = vunpack.c.l.bf16 %v574
        %v607 = vunpack.c.l.bf16 %v575
        %v608 = vunpack.c.l.bf16 %v576
        %v609 = vunpack.c.l.bf16 %v577
        %v610 = vunpack.c.l.bf16 %v578
        %v611 = vunpack.c.l.bf16 %v579
        %v612 = vunpack.c.l.bf16 %v580
        %v613 = vunpack.c.l.bf16 %v581
        %v614 = vunpack.c.l.bf16 %v582
        %v615 = vunpack.c.l.bf16 %v583
        %v616 = vunpack.c.l.bf16 %v584
        %v617 = vunpack.c.l.bf16 %v585
        %v618 = vunpack.c.l.bf16 %v586
        %v619 = vunpack.c.l.bf16 %v587
        %v620 = vunpack.c.l.bf16 %v588
        %v621 = vunpack.c.l.bf16 %v589
        %v622 = vunpack.c.l.bf16 %v590
        %v623 = vunpack.c.l.bf16 %v591
        %v624 = vunpack.c.l.bf16 %v592
        %v625 = vunpack.c.l.bf16 %v593
        %v626 = vunpack.c.l.bf16 %v594
        %v627 = vunpack.c.l.bf16 %v595
        %v628 = vunpack.c.l.bf16 %v596
        %v629 = vunpack.c.l.bf16 %v597
        %v630 = vunpack.c.l.bf16 %v598
        %v631 = vunpack.c.l.bf16 %v599
        %p632 = scmp.eq.s32.totalorder %s32, 0
        // Predicated region
        $region53: #{tpu_custom_call.1} parent=51 // pred_check
          %p633 = pneg %p632
        $region54: #{tpu_custom_call.1} parent=51 // pred_check_branch
          %635 = sbr.rel (%p633) target = $region56
        $region55: #{tpu_custom_call.1} parent=51 // pred_region
          %vm636 = vcmask 253952
          %637 = vst.msk [vmem:[#allocation2] sm:$0x1] %vm636, 0.0
          %638 = vst.msk [vmem:[#allocation3] sm:$0x1] %vm636, 0.0
          %639 = vst.msk [vmem:[#allocation4] sm:$0x1] %vm636, 0.0
          %640 = vst.msk [vmem:[#allocation5] sm:$0x1] %vm636, -inf
          %641 = vst.msk [vmem:[#allocation6] sm:$0x1] %vm636, -inf
          %642 = vst.msk [vmem:[#allocation7] sm:$0x1] %vm636, -inf
        $region56: #{tpu_custom_call.1} parent=51 // pred_fallthru
          _
        %v643 = vld [vmem:[#allocation2] sm:$0x1]
        %vm644 = vcmask 261120
        %v645 = vsel %vm644, %v472, 0.0
        %v646 = vsel %vm644, %v473, 0.0
        %v647 = vadd.f32 %v645, %v646
        %v648 = vsel %vm644, %v474, 0.0
        %v649 = vadd.f32 %v647, %v648
        %v650 = vsel %vm644, %v475, 0.0
        %v651 = vadd.f32 %v649, %v650
        %v652 = vsel %vm644, %v476, 0.0
        %v653 = vadd.f32 %v651, %v652
        %v654 = vsel %vm644, %v477, 0.0
        %v655 = vadd.f32 %v653, %v654
        %v656 = vsel %vm644, %v478, 0.0
        %v657 = vadd.f32 %v655, %v656
        %v658 = vsel %vm644, %v479, 0.0
        %v659 = vadd.f32 %v657, %v658
        %v660 = vsel %vm644, %v480, 0.0
        %v661 = vadd.f32 %v659, %v660
        %v662 = vsel %vm644, %v481, 0.0
        %v663 = vadd.f32 %v661, %v662
        %v664 = vsel %vm644, %v482, 0.0
        %v665 = vadd.f32 %v663, %v664
        %v666 = vsel %vm644, %v483, 0.0
        %v667 = vadd.f32 %v665, %v666
        %v668 = vsel %vm644, %v484, 0.0
        %v669 = vadd.f32 %v667, %v668
        %v670 = vsel %vm644, %v485, 0.0
        %v671 = vadd.f32 %v669, %v670
        %v672 = vsel %vm644, %v486, 0.0
        %v673 = vadd.f32 %v671, %v672
        %v674 = vsel %vm644, %v487, 0.0
        %v675 = vadd.f32 %v673, %v674
        %v676 = vsel %vm644, %v488, 0.0
        %v677 = vadd.f32 %v675, %v676
        %v678 = vsel %vm644, %v489, 0.0
        %v679 = vadd.f32 %v677, %v678
        %v680 = vsel %vm644, %v490, 0.0
        %v681 = vadd.f32 %v679, %v680
        %v682 = vsel %vm644, %v491, 0.0
        %v683 = vadd.f32 %v681, %v682
        %v684 = vsel %vm644, %v492, 0.0
        %v685 = vadd.f32 %v683, %v684
        %v686 = vsel %vm644, %v493, 0.0
        %v687 = vadd.f32 %v685, %v686
        %v688 = vsel %vm644, %v494, 0.0
        %v689 = vadd.f32 %v687, %v688
        %v690 = vsel %vm644, %v495, 0.0
        %v691 = vadd.f32 %v689, %v690
        %v692 = vsel %vm644, %v496, 0.0
        %v693 = vadd.f32 %v691, %v692
        %v694 = vsel %vm644, %v497, 0.0
        %v695 = vadd.f32 %v693, %v694
        %v696 = vsel %vm644, %v498, 0.0
        %v697 = vadd.f32 %v695, %v696
        %v698 = vsel %vm644, %v499, 0.0
        %v699 = vadd.f32 %v697, %v698
        %v700 = vsel %vm644, %v500, 0.0
        %v701 = vadd.f32 %v699, %v700
        %v702 = vsel %vm644, %v501, 0.0
        %v703 = vadd.f32 %v701, %v702
        %v704 = vsel %vm644, %v502, 0.0
        %v705 = vadd.f32 %v703, %v704
        %v706 = vsel %vm644, %v503, 0.0
        %v707 = vadd.f32 %v705, %v706
        %v708 = vrot.slane %v707, 4
        %v709 = vadd.f32 %v707, %v708
        %v710 = vrot.slane %v709, 2
        %v711 = vadd.f32 %v709, %v710
        %v712 = vrot.slane %v711, 1
        %v713 = vadd.f32 %v711, %v712
        %v714 = vadd.f32 %v643, %v713
        %vm715 = vcmask 253952
        %716 = vst.msk [vmem:[#allocation2] sm:$0x1] %vm715, %v714
        %v717 = vld [vmem:[#allocation3] sm:$0x1]
        %v718 = vsel %vm644, %v536, 0.0
        %v719 = vsel %vm644, %v537, 0.0
        %v720 = vadd.f32 %v718, %v719
        %v721 = vsel %vm644, %v538, 0.0
        %v722 = vadd.f32 %v720, %v721
        %v723 = vsel %vm644, %v539, 0.0
        %v724 = vadd.f32 %v722, %v723
        %v725 = vsel %vm644, %v540, 0.0
        %v726 = vadd.f32 %v724, %v725
        %v727 = vsel %vm644, %v541, 0.0
        %v728 = vadd.f32 %v726, %v727
        %v729 = vsel %vm644, %v542, 0.0
        %v730 = vadd.f32 %v728, %v729
        %v731 = vsel %vm644, %v543, 0.0
        %v732 = vadd.f32 %v730, %v731
        %v733 = vsel %vm644, %v544, 0.0
        %v734 = vadd.f32 %v732, %v733
        %v735 = vsel %vm644, %v545, 0.0
        %v736 = vadd.f32 %v734, %v735
        %v737 = vsel %vm644, %v546, 0.0
        %v738 = vadd.f32 %v736, %v737
        %v739 = vsel %vm644, %v547, 0.0
        %v740 = vadd.f32 %v738, %v739
        %v741 = vsel %vm644, %v548, 0.0
        %v742 = vadd.f32 %v740, %v741
        %v743 = vsel %vm644, %v549, 0.0
        %v744 = vadd.f32 %v742, %v743
        %v745 = vsel %vm644, %v550, 0.0
        %v746 = vadd.f32 %v744, %v745
        %v747 = vsel %vm644, %v551, 0.0
        %v748 = vadd.f32 %v746, %v747
        %v749 = vsel %vm644, %v552, 0.0
        %v750 = vadd.f32 %v748, %v749
        %v751 = vsel %vm644, %v553, 0.0
        %v752 = vadd.f32 %v750, %v751
        %v753 = vsel %vm644, %v554, 0.0
        %v754 = vadd.f32 %v752, %v753
        %v755 = vsel %vm644, %v555, 0.0
        %v756 = vadd.f32 %v754, %v755
        %v757 = vsel %vm644, %v556, 0.0
        %v758 = vadd.f32 %v756, %v757
        %v759 = vsel %vm644, %v557, 0.0
        %v760 = vadd.f32 %v758, %v759
        %v761 = vsel %vm644, %v558, 0.0
        %v762 = vadd.f32 %v760, %v761
        %v763 = vsel %vm644, %v559, 0.0
        %v764 = vadd.f32 %v762, %v763
        %v765 = vsel %vm644, %v560, 0.0
        %v766 = vadd.f32 %v764, %v765
        %v767 = vsel %vm644, %v561, 0.0
        %v768 = vadd.f32 %v766, %v767
        %v769 = vsel %vm644, %v562, 0.0
        %v770 = vadd.f32 %v768, %v769
        %v771 = vsel %vm644, %v563, 0.0
        %v772 = vadd.f32 %v770, %v771
        %v773 = vsel %vm644, %v564, 0.0
        %v774 = vadd.f32 %v772, %v773
        %v775 = vsel %vm644, %v565, 0.0
        %v776 = vadd.f32 %v774, %v775
        %v777 = vsel %vm644, %v566, 0.0
        %v778 = vadd.f32 %v776, %v777
        %v779 = vsel %vm644, %v567, 0.0
        %v780 = vadd.f32 %v778, %v779
        %v781 = vrot.slane %v780, 4
        %v782 = vadd.f32 %v780, %v781
        %v783 = vrot.slane %v782, 2
        %v784 = vadd.f32 %v782, %v783
        %v785 = vrot.slane %v784, 1
        %v786 = vadd.f32 %v784, %v785
        %v787 = vadd.f32 %v717, %v786
        %788 = vst.msk [vmem:[#allocation3] sm:$0x1] %vm715, %v787
        %v789 = vld [vmem:[#allocation4] sm:$0x1]
        %v790 = vsel %vm644, %v600, 0.0
        %v791 = vsel %vm644, %v601, 0.0
        %v792 = vadd.f32 %v790, %v791
        %v793 = vsel %vm644, %v602, 0.0
        %v794 = vadd.f32 %v792, %v793
        %v795 = vsel %vm644, %v603, 0.0
        %v796 = vadd.f32 %v794, %v795
        %v797 = vsel %vm644, %v604, 0.0
        %v798 = vadd.f32 %v796, %v797
        %v799 = vsel %vm644, %v605, 0.0
        %v800 = vadd.f32 %v798, %v799
        %v801 = vsel %vm644, %v606, 0.0
        %v802 = vadd.f32 %v800, %v801
        %v803 = vsel %vm644, %v607, 0.0
        %v804 = vadd.f32 %v802, %v803
        %v805 = vsel %vm644, %v608, 0.0
        %v806 = vadd.f32 %v804, %v805
        %v807 = vsel %vm644, %v609, 0.0
        %v808 = vadd.f32 %v806, %v807
        %v809 = vsel %vm644, %v610, 0.0
        %v810 = vadd.f32 %v808, %v809
        %v811 = vsel %vm644, %v611, 0.0
        %v812 = vadd.f32 %v810, %v811
        %v813 = vsel %vm644, %v612, 0.0
        %v814 = vadd.f32 %v812, %v813
        %v815 = vsel %vm644, %v613, 0.0
        %v816 = vadd.f32 %v814, %v815
        %v817 = vsel %vm644, %v614, 0.0
        %v818 = vadd.f32 %v816, %v817
        %v819 = vsel %vm644, %v615, 0.0
        %v820 = vadd.f32 %v818, %v819
        %v821 = vsel %vm644, %v616, 0.0
        %v822 = vadd.f32 %v820, %v821
        %v823 = vsel %vm644, %v617, 0.0
        %v824 = vadd.f32 %v822, %v823
        %v825 = vsel %vm644, %v618, 0.0
        %v826 = vadd.f32 %v824, %v825
        %v827 = vsel %vm644, %v619, 0.0
        %v828 = vadd.f32 %v826, %v827
        %v829 = vsel %vm644, %v620, 0.0
        %v830 = vadd.f32 %v828, %v829
        %v831 = vsel %vm644, %v621, 0.0
        %v832 = vadd.f32 %v830, %v831
        %v833 = vsel %vm644, %v622, 0.0
        %v834 = vadd.f32 %v832, %v833
        %v835 = vsel %vm644, %v623, 0.0
        %v836 = vadd.f32 %v834, %v835
        %v837 = vsel %vm644, %v624, 0.0
        %v838 = vadd.f32 %v836, %v837
        %v839 = vsel %vm644, %v625, 0.0
        %v840 = vadd.f32 %v838, %v839
        %v841 = vsel %vm644, %v626, 0.0
        %v842 = vadd.f32 %v840, %v841
        %v843 = vsel %vm644, %v627, 0.0
        %v844 = vadd.f32 %v842, %v843
        %v845 = vsel %vm644, %v628, 0.0
        %v846 = vadd.f32 %v844, %v845
        %v847 = vsel %vm644, %v629, 0.0
        %v848 = vadd.f32 %v846, %v847
        %v849 = vsel %vm644, %v630, 0.0
        %v850 = vadd.f32 %v848, %v849
        %v851 = vsel %vm644, %v631, 0.0
        %v852 = vadd.f32 %v850, %v851
        %v853 = vrot.slane %v852, 4
        %v854 = vadd.f32 %v852, %v853
        %v855 = vrot.slane %v854, 2
        %v856 = vadd.f32 %v854, %v855
        %v857 = vrot.slane %v856, 1
        %v858 = vadd.f32 %v856, %v857
        %v859 = vadd.f32 %v789, %v858
        %860 = vst.msk [vmem:[#allocation4] sm:$0x1] %vm715, %v859
        %v861 = vld [vmem:[#allocation5] sm:$0x1]
        %v862 = vsel %vm644, %v472, -inf
        %v863 = vsel %vm644, %v473, -inf
        %v864 = vsel %vm644, %v474, -inf
        %v865 = vsel %vm644, %v475, -inf
        %v866 = vsel %vm644, %v476, -inf
        %v867 = vmax.f32 %v862, %v866
        %v868 = vsel %vm644, %v477, -inf
        %v869 = vmax.f32 %v863, %v868
        %v870 = vsel %vm644, %v478, -inf
        %v871 = vmax.f32 %v864, %v870
        %v872 = vsel %vm644, %v479, -inf
        %v873 = vmax.f32 %v865, %v872
        %v874 = vsel %vm644, %v480, -inf
        %v875 = vmax.f32 %v867, %v874
        %v876 = vsel %vm644, %v481, -inf
        %v877 = vmax.f32 %v869, %v876
        %v878 = vsel %vm644, %v482, -inf
        %v879 = vmax.f32 %v871, %v878
        %v880 = vsel %vm644, %v483, -inf
        %v881 = vmax.f32 %v873, %v880
        %v882 = vsel %vm644, %v484, -inf
        %v883 = vmax.f32 %v875, %v882
        %v884 = vsel %vm644, %v485, -inf
        %v885 = vmax.f32 %v877, %v884
        %v886 = vsel %vm644, %v486, -inf
        %v887 = vmax.f32 %v879, %v886
        %v888 = vsel %vm644, %v487, -inf
        %v889 = vmax.f32 %v881, %v888
        %v890 = vsel %vm644, %v488, -inf
        %v891 = vmax.f32 %v883, %v890
        %v892 = vsel %vm644, %v489, -inf
        %v893 = vmax.f32 %v885, %v892
        %v894 = vsel %vm644, %v490, -inf
        %v895 = vmax.f32 %v887, %v894
        %v896 = vsel %vm644, %v491, -inf
        %v897 = vmax.f32 %v889, %v896
        %v898 = vsel %vm644, %v492, -inf
        %v899 = vmax.f32 %v891, %v898
        %v900 = vsel %vm644, %v493, -inf
        %v901 = vmax.f32 %v893, %v900
        %v902 = vsel %vm644, %v494, -inf
        %v903 = vmax.f32 %v895, %v902
        %v904 = vsel %vm644, %v495, -inf
        %v905 = vmax.f32 %v897, %v904
        %v906 = vsel %vm644, %v496, -inf
        %v907 = vmax.f32 %v899, %v906
        %v908 = vsel %vm644, %v497, -inf
        %v909 = vmax.f32 %v901, %v908
        %v910 = vsel %vm644, %v498, -inf
        %v911 = vmax.f32 %v903, %v910
        %v912 = vsel %vm644, %v499, -inf
        %v913 = vmax.f32 %v905, %v912
        %v914 = vsel %vm644, %v500, -inf
        %v915 = vmax.f32 %v907, %v914
        %v916 = vsel %vm644, %v501, -inf
        %v917 = vmax.f32 %v909, %v916
        %v918 = vsel %vm644, %v502, -inf
        %v919 = vmax.f32 %v911, %v918
        %v920 = vsel %vm644, %v503, -inf
        %v921 = vmax.f32 %v913, %v920
        %v922 = vmax.f32 %v915, %v917
        %v923 = vmax.f32 %v919, %v921
        %v924 = vmax.f32 %v922, %v923
        %v925 = vrot.slane %v924, 4
        %v926 = vmax.f32 %v924, %v925
        %v927 = vrot.slane %v926, 2
        %v928 = vmax.f32 %v926, %v927
        %v929 = vrot.slane %v928, 1
        %v930 = vmax.f32 %v928, %v929
        %v931 = vmax.f32 %v861, %v930
        %932 = vst.msk [vmem:[#allocation5] sm:$0x1] %vm715, %v931
        %v933 = vld [vmem:[#allocation6] sm:$0x1]
        %v934 = vsel %vm644, %v536, -inf
        %v935 = vsel %vm644, %v537, -inf
        %v936 = vsel %vm644, %v538, -inf
        %v937 = vsel %vm644, %v539, -inf
        %v938 = vsel %vm644, %v540, -inf
        %v939 = vmax.f32 %v934, %v938
        %v940 = vsel %vm644, %v541, -inf
        %v941 = vmax.f32 %v935, %v940
        %v942 = vsel %vm644, %v542, -inf
        %v943 = vmax.f32 %v936, %v942
        %v944 = vsel %vm644, %v543, -inf
        %v945 = vmax.f32 %v937, %v944
        %v946 = vsel %vm644, %v544, -inf
        %v947 = vmax.f32 %v939, %v946
        %v948 = vsel %vm644, %v545, -inf
        %v949 = vmax.f32 %v941, %v948
        %v950 = vsel %vm644, %v546, -inf
        %v951 = vmax.f32 %v943, %v950
        %v952 = vsel %vm644, %v547, -inf
        %v953 = vmax.f32 %v945, %v952
        %v954 = vsel %vm644, %v548, -inf
        %v955 = vmax.f32 %v947, %v954
        %v956 = vsel %vm644, %v549, -inf
        %v957 = vmax.f32 %v949, %v956
        %v958 = vsel %vm644, %v550, -inf
        %v959 = vmax.f32 %v951, %v958
        %v960 = vsel %vm644, %v551, -inf
        %v961 = vmax.f32 %v953, %v960
        %v962 = vsel %vm644, %v552, -inf
        %v963 = vmax.f32 %v955, %v962
        %v964 = vsel %vm644, %v553, -inf
        %v965 = vmax.f32 %v957, %v964
        %v966 = vsel %vm644, %v554, -inf
        %v967 = vmax.f32 %v959, %v966
        %v968 = vsel %vm644, %v555, -inf
        %v969 = vmax.f32 %v961, %v968
        %v970 = vsel %vm644, %v556, -inf
        %v971 = vmax.f32 %v963, %v970
        %v972 = vsel %vm644, %v557, -inf
        %v973 = vmax.f32 %v965, %v972
        %v974 = vsel %vm644, %v558, -inf
        %v975 = vmax.f32 %v967, %v974
        %v976 = vsel %vm644, %v559, -inf
        %v977 = vmax.f32 %v969, %v976
        %v978 = vsel %vm644, %v560, -inf
        %v979 = vmax.f32 %v971, %v978
        %v980 = vsel %vm644, %v561, -inf
        %v981 = vmax.f32 %v973, %v980
        %v982 = vsel %vm644, %v562, -inf
        %v983 = vmax.f32 %v975, %v982
        %v984 = vsel %vm644, %v563, -inf
        %v985 = vmax.f32 %v977, %v984
        %v986 = vsel %vm644, %v564, -inf
        %v987 = vmax.f32 %v979, %v986
        %v988 = vsel %vm644, %v565, -inf
        %v989 = vmax.f32 %v981, %v988
        %v990 = vsel %vm644, %v566, -inf
        %v991 = vmax.f32 %v983, %v990
        %v992 = vsel %vm644, %v567, -inf
        %v993 = vmax.f32 %v985, %v992
        %v994 = vmax.f32 %v987, %v989
        %v995 = vmax.f32 %v991, %v993
        %v996 = vmax.f32 %v994, %v995
        %v997 = vrot.slane %v996, 4
        %v998 = vmax.f32 %v996, %v997
        %v999 = vrot.slane %v998, 2
        %v1000 = vmax.f32 %v998, %v999
        %v1001 = vrot.slane %v1000, 1
        %v1002 = vmax.f32 %v1000, %v1001
        %v1003 = vmax.f32 %v933, %v1002
        %1004 = vst.msk [vmem:[#allocation6] sm:$0x1] %vm715, %v1003
        %v1005 = vld [vmem:[#allocation7] sm:$0x1]
        %v1006 = vsel %vm644, %v600, -inf
        %v1007 = vsel %vm644, %v601, -inf
        %v1008 = vsel %vm644, %v602, -inf
        %v1009 = vsel %vm644, %v603, -inf
        %v1010 = vsel %vm644, %v604, -inf
        %v1011 = vmax.f32 %v1006, %v1010
        %v1012 = vsel %vm644, %v605, -inf
        %v1013 = vmax.f32 %v1007, %v1012
        %v1014 = vsel %vm644, %v606, -inf
        %v1015 = vmax.f32 %v1008, %v1014
        %v1016 = vsel %vm644, %v607, -inf
        %v1017 = vmax.f32 %v1009, %v1016
        %v1018 = vsel %vm644, %v608, -inf
        %v1019 = vmax.f32 %v1011, %v1018
        %v1020 = vsel %vm644, %v609, -inf
        %v1021 = vmax.f32 %v1013, %v1020
        %v1022 = vsel %vm644, %v610, -inf
        %v1023 = vmax.f32 %v1015, %v1022
        %v1024 = vsel %vm644, %v611, -inf
        %v1025 = vmax.f32 %v1017, %v1024
        %v1026 = vsel %vm644, %v612, -inf
        %v1027 = vmax.f32 %v1019, %v1026
        %v1028 = vsel %vm644, %v613, -inf
        %v1029 = vmax.f32 %v1021, %v1028
        %v1030 = vsel %vm644, %v614, -inf
        %v1031 = vmax.f32 %v1023, %v1030
        %v1032 = vsel %vm644, %v615, -inf
        %v1033 = vmax.f32 %v1025, %v1032
        %v1034 = vsel %vm644, %v616, -inf
        %v1035 = vmax.f32 %v1027, %v1034
        %v1036 = vsel %vm644, %v617, -inf
        %v1037 = vmax.f32 %v1029, %v1036
        %v1038 = vsel %vm644, %v618, -inf
        %v1039 = vmax.f32 %v1031, %v1038
        %v1040 = vsel %vm644, %v619, -inf
        %v1041 = vmax.f32 %v1033, %v1040
        %v1042 = vsel %vm644, %v620, -inf
        %v1043 = vmax.f32 %v1035, %v1042
        %v1044 = vsel %vm644, %v621, -inf
        %v1045 = vmax.f32 %v1037, %v1044
        %v1046 = vsel %vm644, %v622, -inf
        %v1047 = vmax.f32 %v1039, %v1046
        %v1048 = vsel %vm644, %v623, -inf
        %v1049 = vmax.f32 %v1041, %v1048
        %v1050 = vsel %vm644, %v624, -inf
        %v1051 = vmax.f32 %v1043, %v1050
        %v1052 = vsel %vm644, %v625, -inf
        %v1053 = vmax.f32 %v1045, %v1052
        %v1054 = vsel %vm644, %v626, -inf
        %v1055 = vmax.f32 %v1047, %v1054
        %v1056 = vsel %vm644, %v627, -inf
        %v1057 = vmax.f32 %v1049, %v1056
        %v1058 = vsel %vm644, %v628, -inf
        %v1059 = vmax.f32 %v1051, %v1058
        %v1060 = vsel %vm644, %v629, -inf
        %v1061 = vmax.f32 %v1053, %v1060
        %v1062 = vsel %vm644, %v630, -inf
        %v1063 = vmax.f32 %v1055, %v1062
        %v1064 = vsel %vm644, %v631, -inf
        %v1065 = vmax.f32 %v1057, %v1064
        %v1066 = vmax.f32 %v1059, %v1061
        %v1067 = vmax.f32 %v1063, %v1065
        %v1068 = vmax.f32 %v1066, %v1067
        %v1069 = vrot.slane %v1068, 4
        %v1070 = vmax.f32 %v1068, %v1069
        %v1071 = vrot.slane %v1070, 2
        %v1072 = vmax.f32 %v1070, %v1071
        %v1073 = vrot.slane %v1072, 1
        %v1074 = vmax.f32 %v1072, %v1073
        %v1075 = vmax.f32 %v1005, %v1074
        %1076 = vst.msk [vmem:[#allocation7] sm:$0x1] %vm715, %v1075
        // Predicated region
        $region57: #{tpu_custom_call.1} parent=51 // pred_check
          %p1077 = pneg %p632
        $region58: #{tpu_custom_call.1} parent=51 // pred_check_branch
          %1079 = sbr.rel (%p1077) target = $region60
        $region59: #{tpu_custom_call.1} parent=51 // pred_region
          %v1080 = vld [vmem:[#allocation2] sm:$0x1]
          %v1081 = vmul.f32 %v1080, 0.00390625
          %v1082 = vld [vmem:[#allocation5] sm:$0x1]
          %v1083 = vadd.f32 %v1081, %v1082
          %v1084 = vld [vmem:[#allocation3] sm:$0x1]
          %v1085 = vmul.f32 %v1084, 0.00390625
          %v1086 = vld [vmem:[#allocation6] sm:$0x1]
          %v1087 = vadd.f32 %v1085, %v1086
          %v1088 = vld [vmem:[#allocation4] sm:$0x1]
          %v1089 = vmul.f32 %v1088, 0.00390625
          %v1090 = vld [vmem:[#allocation7] sm:$0x1]
          %v1091 = vadd.f32 %v1089, %v1090
          %v1092 = vld [vmem:[%s3] sm:$0x3]
          %v1093 = vld [vmem:[%s4] sm:$0x3]
          %v1094 = vld [vmem:[%s5] sm:$0x3]
          %v1095 = vld [vmem:[%s6] sm:$0x3]
          %v1096 = vld [vmem:[%s7] sm:$0x1]
          %v1098 = vperm.slane %v1083, 0
          %v1100 = vmul.f32 %v1098, %v1092
          %vm1101 = vcmask 254976
          %v1102 = vsel %vm1101, %v1100, 0.0
          %1103 = vadd.xlane.f32.xlu0 %v1102
          %v1104 = vpop.xlane.xlu0 %1103
          %v1106 = vperm.slane %v1087, 0
          %v1108 = vmul.f32 %v1106, %v1093
          %v1109 = vsel %vm1101, %v1108, 0.0
          %1110 = vadd.xlane.f32.xlu0 %v1109
          %v1111 = vpop.xlane.xlu0 %1110
          %v1112 = vadd.f32 %v1104, %v1111
          %v1113 = vadd.f32 %v1112, %v1094
          %v1114 = vmax.f32 %v1113, 0.0
          %1116 = vset.pattern.permute.xlu0 0
          %1117 = vperm.xlu0 %1116, %v1114
          %v1118 = vpop.permute.xlu0 %1117
          %v1120 = vmul.f32 %v1118, %v1095
          %v1121 = vsel %vm1101, %v1120, 0.0
          %v1122 = vrot.slane %v1121, 4
          %v1123 = vadd.f32 %v1121, %v1122
          %v1124 = vrot.slane %v1123, 2
          %v1125 = vadd.f32 %v1123, %v1124
          %v1126 = vrot.slane %v1125, 1
          %v1127 = vadd.f32 %v1125, %v1126
          %v1128 = vadd.f32 %v1127, %v1096
          %v1129 = vsub.f32 0.0, %v1128
          %v1130 = vmul.f32 %v1129, 1.442695
          %v1131 = vpow.pop %v1130
          %v1132 = vadd.f32 %v1131, 1.0
          %v1133 = vrcp.pop %v1132
          %v1134 = vmul.f32 %v1132, %v1133
          %v1135 = vsub.f32 1.0, %v1134
          %v1136 = vmul.f32 %v1133, %v1135
          %v1137 = vadd.f32 %v1133, %v1136
          %vm1138 = vweird.f32 %v1132
          %vm1139 = vweird.f32 %v1133
          %vm1140 = vmor %vm1138, %vm1139
          %v1141 = vsel %vm1140, %v1133, %v1137
          %v1142 = vand.u32 2147483647, %v1132
          %vm1143 = vcmp.eq.f32.partialorder %v1142, 8.507059e+37
          %v1144 = vand.u32 %v1132, 2147483648
          %v1145 = vor.u32 1.1754944e-38, %v1144
          %v1146 = vsel %vm1143, %v1145, %v1141
          %v1147 = vmul.f32 1.0, %v1146
          %1148 = vst.msk [vmem:[%s403] sm:$0x1] %vm715, %v1147
          %v1150 = vperm.slane %v1091, 0
          %v1152 = vmul.f32 %v1150, %v1093
          %v1153 = vsel %vm1101, %v1152, 0.0
          %1154 = vadd.xlane.f32.xlu0 %v1153
          %v1155 = vpop.xlane.xlu0 %1154
          %v1156 = vadd.f32 %v1104, %v1155
          %v1157 = vadd.f32 %v1156, %v1094
          %v1158 = vmax.f32 %v1157, 0.0
          %1160 = vset.pattern.permute.xlu0 0
          %1161 = vperm.xlu0 %1160, %v1158
          %v1162 = vpop.permute.xlu0 %1161
          %v1164 = vmul.f32 %v1162, %v1095
          %v1165 = vsel %vm1101, %v1164, 0.0
          %v1166 = vrot.slane %v1165, 4
          %v1167 = vadd.f32 %v1165, %v1166
          %v1168 = vrot.slane %v1167, 2
          %v1169 = vadd.f32 %v1167, %v1168
          %v1170 = vrot.slane %v1169, 1
          %v1171 = vadd.f32 %v1169, %v1170
          %v1172 = vadd.f32 %v1171, %v1096
          %v1173 = vsub.f32 0.0, %v1172
          %v1174 = vmul.f32 %v1173, 1.442695
          %v1175 = vpow.pop %v1174
          %v1176 = vadd.f32 %v1175, 1.0
          %v1177 = vrcp.pop %v1176
          %v1178 = vmul.f32 %v1176, %v1177
          %v1179 = vsub.f32 1.0, %v1178
          %v1180 = vmul.f32 %v1177, %v1179
          %v1181 = vadd.f32 %v1177, %v1180
          %vm1182 = vweird.f32 %v1176
          %vm1183 = vweird.f32 %v1177
          %vm1184 = vmor %vm1182, %vm1183
          %v1185 = vsel %vm1184, %v1177, %v1181
          %v1186 = vand.u32 2147483647, %v1176
          %vm1187 = vcmp.eq.f32.partialorder %v1186, 8.507059e+37
          %v1188 = vand.u32 %v1176, 2147483648
          %v1189 = vor.u32 1.1754944e-38, %v1188
          %v1190 = vsel %vm1187, %v1189, %v1185
          %v1191 = vmul.f32 1.0, %v1190
          %1192 = vst.msk [vmem:[%s409] sm:$0x1] %vm715, %v1191
        $region60: #{tpu_custom_call.1} parent=51 // pred_fallthru
          _
        %s1193 = sand.u32 %s236, 1
        %s1194 = scalar_lea.sflag [#allocation9], %s1193
        %s1195 = sand.u32 %s236, 1
        %s1196 = scalar_lea.vmem [#allocation8], %s1195
        %s1197 = sand.u32 %s262, 1
        %s1198 = scalar_lea.sflag [#allocation11], %s1197
        %s1199 = sand.u32 %s262, 1
        %s1200 = scalar_lea.vmem [#allocation10], %s1199
        // Predicated region
        $region61: #{tpu_custom_call.1} parent=51 // pred_check
          %p1201 = pneg %p246
        $region62: #{tpu_custom_call.1} parent=51 // pred_check_branch
          %1203 = sbr.rel (%p1201) target = $region64
        $region63: #{tpu_custom_call.1} parent=51 // pred_region
          %1205 = vsyncadd %s1194, 0
          %s1206 = scalar_lea.hbm %s8, %s31
          %s1208 = sshll.u32 %s1196, 4
          %s1209 = int_to_ptr.vmem [resolvable:$true] %s1208
          %s1210 = sshll.u32 %s1206, 4
          %s1211 = int_to_ptr.hbm [resolvable:$true] %s1210
          %1213 = dma.vmem_to_hbm [thread:$0]  %s1209, 16, %s1211, %s1194
        $region64: #{tpu_custom_call.1} parent=51 // pred_fallthru
          _
        // Predicated region
        $region65: #{tpu_custom_call.1} parent=51 // pred_check
          %p1214 = pneg %p272
        $region66: #{tpu_custom_call.1} parent=51 // pred_check_branch
          %1216 = sbr.rel (%p1214) target = $region68
        $region67: #{tpu_custom_call.1} parent=51 // pred_region
          %1218 = vsyncadd %s1198, 0
          %s1219 = scalar_lea.hbm %s9, %s31
          %s1221 = sshll.u32 %s1200, 4
          %s1222 = int_to_ptr.vmem [resolvable:$true] %s1221
          %s1223 = sshll.u32 %s1219, 4
          %s1224 = int_to_ptr.hbm [resolvable:$true] %s1223
          %1226 = dma.vmem_to_hbm [thread:$0]  %s1222, 16, %s1224, %s1198
        $region68: #{tpu_custom_call.1} parent=51 // pred_fallthru
          _
      $region52: #{tpu_custom_call.1} parent=5 // pred_fallthru
        _
      %p1227 = scmp.le.s32.totalorder 2, %s22
      // Predicated region
      $region69: #{tpu_custom_call.1} parent=5 // pred_check
        %p1228 = pneg %p1227
      $region70: #{tpu_custom_call.1} parent=5 // pred_check_branch
        %1230 = sbr.rel (%p1228) target = $region72
      $region71: #{tpu_custom_call.1} parent=5 // pred_region
        %s1231 = ssub.s32 %s22, 2
        // Predicated region
        $region73: #{tpu_custom_call.1} parent=71 // pred_check
          %p1232 = pneg %p252
        $region74: #{tpu_custom_call.1} parent=71 // pred_check_branch
          %1234 = sbr.rel (%p1232) target = $region76
        $region75: #{tpu_custom_call.1} parent=71 // pred_region
          %s1235 = sand.u32 %s237, 1
          %s1236 = scalar_lea.sflag [#allocation9], %s1235
          %s1237 = sand.u32 %s237, 1
          %s1238 = scalar_lea.vmem [#allocation8], %s1237
          %1240 = dma.done %s1236, 16
        $region76: #{tpu_custom_call.1} parent=71 // pred_fallthru
          _
        // Predicated region
        $region77: #{tpu_custom_call.1} parent=71 // pred_check
          %p1241 = pneg %p278
        $region78: #{tpu_custom_call.1} parent=71 // pred_check_branch
          %1243 = sbr.rel (%p1241) target = $region80
        $region79: #{tpu_custom_call.1} parent=71 // pred_region
          %s1244 = sand.u32 %s263, 1
          %s1245 = scalar_lea.sflag [#allocation11], %s1244
          %s1246 = sand.u32 %s263, 1
          %s1247 = scalar_lea.vmem [#allocation10], %s1246
          %1249 = dma.done %s1245, 16
        $region80: #{tpu_custom_call.1} parent=71 // pred_fallthru
          _
      $region72: #{tpu_custom_call.1} parent=5 // pred_fallthru
        _
    $region6: #{tpu_custom_call.1} parent=1 // loop_footer
      %s26 = sadd.s32 1, %s22
    $region7: #{tpu_custom_call.1} parent=1 // loop_footer_branch
      %21 = sbr.rel target = $region3
    $region8: #{tpu_custom_call.1} parent=1 // loop_exit
      _
    %1250 = vsyncpa [#allocation9], 1
    %s1251 = scalar_lea.sflag [#allocation9], 1
    %1252 = vsyncpa %s1251, 1
    %1253 = vsyncpa [#allocation11], 1
    %s1254 = scalar_lea.sflag [#allocation11], 1
    %1255 = vsyncpa %s1254, 1

</llo_original>
